<compile_context>
chip_gen: v6e
topology: v6e:2x2x1
jax: 0.10.0
libtpu: 0.0.40
codegen_flags: <defaults>
</compile_context>

<pallas_src>
import functools

import jax
import jax.numpy as jnp
from jax.experimental import pallas as pl
from jax.experimental.pallas import tpu as pltpu


def _dcu_kernel(x_ref, s1_ref, b1_ref, w1_ref, cb1_ref, w2_ref, cb2_ref,
                o_ref, pad1_ref, pad2_ref, *, stride, K):
    """One batch block per grid step, NCL layout (C on sublanes, L on lanes).

    x_ref  : (B, Cin,  L)        input slab
    s1/b1  : (1, Cin,  1)        folded BN1 scale / bias (f32)
    w1     : (K*Cin,  Cout, 1)   conv1 weight columns, BN2 pre-folded
                                 (row k*Cin+ci holds w1[:, ci, k])
    cb1    : (1, Cout, 1)        conv1 bias with BN2 folded in
    w2     : (K*Cout, Cout, 1)   conv2 weight columns
    cb2    : (1, Cout, 1)        conv2 bias
    o_ref  : (B, Cout, L2)       output slab (lane-dense along L2)
    pad1   : (B, Cin,  L  + 2)   VMEM scratch (padding=1 for conv1)
    pad2   : (B, Cout, L1 + 2)   VMEM scratch (padding=1 for conv2)
    """
    B, Cin, L = x_ref.shape
    _, Cout, L2 = o_ref.shape
    L1 = pad2_ref.shape[2] - 2

    # ---- BN1 (folded affine) + ReLU, f32 elementwise ----
    y0 = jnp.maximum(x_ref[...].astype(jnp.float32) * s1_ref[...] + b1_ref[...],
                     0.0)

    # ---- zero pad along L (lane axis): only the two boundary lanes written.
    # (Per review: must stay per-step; with a "parallel" grid the second
    #  TensorCore never executes program_id 0, so this cannot be hoisted.)
    zcol1 = jnp.zeros((B, Cin, 1), jnp.float32)
    pad1_ref[:, :, pl.ds(0, 1)] = zcol1
    pad1_ref[:, :, pl.ds(L + 1, 1)] = zcol1
    pad1_ref[:, :, pl.ds(1, L)] = y0

    # ---- Conv1d #1 (+ folded BN2) + ReLU: K*Cin lane-dense VPU FMAs ----
    acc1 = jnp.zeros((B, Cout, L1), jnp.float32)
    for k in range(K):
        for ci in range(Cin):
            if stride == 1:
                tap = pad1_ref[:, pl.ds(ci, 1), pl.ds(k, L1)]
            else:
                tap = pad1_ref[:, pl.ds(ci, 1), pl.ds(k, L1, stride=stride)]
            # (Cout, 1) weight column x (B, 1, L1) shifted row -> (B, Cout, L1)
            acc1 = acc1 + w1_ref[k * Cin + ci] * tap
    y1 = jnp.maximum(acc1 + cb1_ref[...], 0.0)

    # ---- zero pad for conv2 (stride 1) ----
    zcol2 = jnp.zeros((B, Cout, 1), jnp.float32)
    pad2_ref[:, :, pl.ds(0, 1)] = zcol2
    pad2_ref[:, :, pl.ds(L1 + 1, 1)] = zcol2
    pad2_ref[:, :, pl.ds(1, L1)] = y1

    # ---- Conv1d #2: K*Cout lane-dense VPU FMAs ----
    acc2 = jnp.zeros((B, Cout, L2), jnp.float32)
    for k in range(K):
        for co in range(Cout):
            tap = pad2_ref[:, pl.ds(co, 1), pl.ds(k, L2)]
            acc2 = acc2 + w2_ref[k * Cout + co] * tap
    o_ref[...] = (acc2 + cb2_ref[...]).astype(o_ref.dtype)


def _fold_bn(gamma, beta, mean, var, eps=1e-5):
    scale = gamma / jnp.sqrt(var + eps)
    bias = beta - mean * scale
    return scale, bias


def _derive_batch_block(N, Cin, Cout, L, L1, L2, in_itemsize, out_itemsize,
                        vmem_budget_bytes):
    """Largest batch block whose per-step VMEM footprint fits the budget."""
    per_elem = (
        2 * in_itemsize * Cin * L          # input block, double-buffered
        + 2 * out_itemsize * Cout * L2     # output block, double-buffered
        + 4 * Cin * (L + 2)                # pad1 scratch (f32)
        + 4 * Cout * (L1 + 2)              # pad2 scratch (f32)
    )
    B = int(max(1, min(N, vmem_budget_bytes // max(per_elem, 1))))
    # v7x has 2 TensorCores and only the batch grid axis is sharded across
    # them: prefer an even number (>= 2) of grid steps when N allows it.
    if N > 1 and int(pl.cdiv(N, B)) % 2 == 1:
        B = int(pl.cdiv(N, int(pl.cdiv(N, B)) + 1))
    return B


def dcu_forward(x_ncl, params, *, down_sample, batch_block=None,
                vmem_budget_bytes=24 * 1024 * 1024):
    """Pallas implementation of DCU.forward (returns BRC(input)); NCL in/out."""
    (g1, be1, m1, v1, w1_pt, cb1,
     g2, be2, m2, v2, w2_pt, cb2) = params
    stride = 2 if down_sample else 1

    N, Cin, L = x_ncl.shape
    Cout, _, K = w1_pt.shape                       # PyTorch conv weight (Cout, Cin, K)
    L1 = (L + 2 - K) // stride + 1                 # conv1 output length (padding=1)
    L2 = L1 + 2 - K + 1                            # conv2 output length (padding=1)

    s1, b1 = _fold_bn(g1, be1, m1, v1)
    s2, b2 = _fold_bn(g2, be2, m2, v2)

    # Fold BN2 into conv1 (affine-on-affine): scale conv1's output channels by
    # s2 and absorb the BN2 bias into conv1's bias.
    w1f = w1_pt * s2[:, None, None]                                    # (Cout, Cin, K)
    # Per-(k, ci) weight columns: row k*Cin+ci holds w1f[:, ci, k] on sublanes.
    w1v = jnp.transpose(w1f, (2, 1, 0)).reshape(K * Cin, Cout, 1)
    w1v = w1v.astype(jnp.float32)
    bias1 = (cb1 * s2 + b2).reshape(1, Cout, 1).astype(jnp.float32)

    w2v = jnp.transpose(w2_pt, (2, 1, 0)).reshape(K * Cout, Cout, 1)
    w2v = w2v.astype(jnp.float32)
    bias2 = cb2.reshape(1, Cout, 1).astype(jnp.float32)

    s1 = s1.reshape(1, Cin, 1).astype(jnp.float32)
    b1 = b1.reshape(1, Cin, 1).astype(jnp.float32)

    out_dtype = x_ncl.dtype
    in_itemsize = jnp.dtype(x_ncl.dtype).itemsize
    out_itemsize = jnp.dtype(out_dtype).itemsize

    # Batch-block the grid (NCL-native: no activation transposes needed).
    if batch_block is None:
        B = _derive_batch_block(N, Cin, Cout, L, L1, L2, in_itemsize,
                                out_itemsize, vmem_budget_bytes)
    else:
        B = int(min(batch_block, N))
    n_blocks = int(pl.cdiv(N, B))
    Np = n_blocks * B
    if Np != N:
        # Padded batch rows do wasted (but harmless) work and are sliced off.
        x_ncl = jnp.pad(x_ncl, ((0, Np - N), (0, 0), (0, 0)))

    kernel = functools.partial(_dcu_kernel, stride=stride, K=K)

    flops = 2 * Np * (L1 * (K * Cin) * Cout + L2 * (K * Cout) * Cout)
    bytes_accessed = int(
        in_itemsize * Np * Cin * L
        + out_itemsize * Np * Cout * L2
        + 4 * (2 * Cin + 2 * Cout + K * Cin * Cout + K * Cout * Cout))

    out = pl.pallas_call(
        kernel,
        out_shape=jax.ShapeDtypeStruct((Np, Cout, L2), out_dtype),
        grid_spec=pltpu.PrefetchScalarGridSpec(
            num_scalar_prefetch=0,
            grid=(n_blocks,),
            in_specs=[
                pl.BlockSpec((B, Cin, L), lambda n: (n, 0, 0)),          # x (NCL)
                pl.BlockSpec((1, Cin, 1), lambda n: (0, 0, 0)),          # s1
                pl.BlockSpec((1, Cin, 1), lambda n: (0, 0, 0)),          # b1
                pl.BlockSpec((K * Cin, Cout, 1), lambda n: (0, 0, 0)),   # w1 columns
                pl.BlockSpec((1, Cout, 1), lambda n: (0, 0, 0)),         # bias1 (BN2 folded)
                pl.BlockSpec((K * Cout, Cout, 1), lambda n: (0, 0, 0)),  # w2 columns
                pl.BlockSpec((1, Cout, 1), lambda n: (0, 0, 0)),         # bias2
            ],
            out_specs=pl.BlockSpec((B, Cout, L2), lambda n: (n, 0, 0)),
            scratch_shapes=[
                pltpu.VMEM((B, Cin, L + 2), jnp.float32),
                pltpu.VMEM((B, Cout, L1 + 2), jnp.float32),
            ],
        ),
        compiler_params=pltpu.CompilerParams(
            dimension_semantics=("parallel",),
            # Explicit scoped-VMEM limit: above the 16/32 MiB defaults, still
            # under v7x's 64 MiB physical VMEM.
            vmem_limit_bytes=48 * 1024 * 1024),
        cost_estimate=pl.CostEstimate(
            flops=int(flops), transcendentals=0, bytes_accessed=bytes_accessed),
    )(x_ncl, s1, b1, w1v, bias1, w2v, bias2)

    return out[:N] if Np != N else out


def dcu_reference(x_ncl, params, *, down_sample):
    """Pure-JAX f32 reference (same eval-mode BN semantics), NCL in/out."""
    (g1, be1, m1, v1, w1_pt, cb1,
     g2, be2, m2, v2, w2_pt, cb2) = params
    stride = 2 if down_sample else 1

    N, Cin, L = x_ncl.shape
    Cout, _, K = w1_pt.shape
    L1 = (L + 2 - K) // stride + 1
    L2 = L1 + 2 - K + 1

    s1, b1 = _fold_bn(g1, be1, m1, v1)
    s2, b2 = _fold_bn(g2, be2, m2, v2)
    w1 = jnp.transpose(w1_pt, (2, 1, 0))
    w2 = jnp.transpose(w2_pt, (2, 1, 0))

    x = jnp.transpose(x_ncl, (0, 2, 1)).astype(jnp.float32)   # NLC
    y0 = jnp.maximum(x * s1[None, None, :] + b1[None, None, :], 0.0)
    y0p = jnp.pad(y0, ((0, 0), (1, 1), (0, 0)))

    acc = jnp.zeros((N, L1, Cout), jnp.float32) + cb1[None, None, :]
    for k in range(K):
        taps = y0p[:, k:k + stride * (L1 - 1) + 1:stride, :]
        acc = acc + jnp.einsum('nlc,cd->nld', taps, w1[k])

    y1 = jnp.maximum(acc * s2[None, None, :] + b2[None, None, :], 0.0)
    y1p = jnp.pad(y1, ((0, 0), (1, 1), (0, 0)))

    acc2 = jnp.zeros((N, L2, Cout), jnp.float32) + cb2[None, None, :]
    for k in range(K):
        acc2 = acc2 + jnp.einsum('nlc,cd->nld', y1p[:, k:k + L2, :], w2[k])

    return jnp.transpose(acc2, (0, 2, 1))


if __name__ == "__main__":
    # Small shapes; N=16 so the batch-blocked grid runs 2 steps of 8.
    N, Cin, Cout, L, K = 16, 4, 8, 16, 3
    down_sample = False

    key = jax.random.PRNGKey(0)
    ks = jax.random.split(key, 13)

    # PyTorch-style input: (N, C_in, L)
    x = jax.random.normal(ks[0], (N, Cin, L), jnp.float32)

    # Deterministic synthetic parameters (shapes follow the nn.Module).
    g1 = jax.random.uniform(ks[1], (Cin,), jnp.float32, 0.5, 1.5)
    be1 = 0.1 * jax.random.normal(ks[2], (Cin,), jnp.float32)
    m1 = 0.1 * jax.random.normal(ks[3], (Cin,), jnp.float32)
    v1 = jax.random.uniform(ks[4], (Cin,), jnp.float32, 0.5, 1.5)
    w1 = 0.2 * jax.random.normal(ks[5], (Cout, Cin, K), jnp.float32)
    cb1 = 0.1 * jax.random.normal(ks[6], (Cout,), jnp.float32)
    g2 = jax.random.uniform(ks[7], (Cout,), jnp.float32, 0.5, 1.5)
    be2 = 0.1 * jax.random.normal(ks[8], (Cout,), jnp.float32)
    m2 = 0.1 * jax.random.normal(ks[9], (Cout,), jnp.float32)
    v2 = jax.random.uniform(ks[10], (Cout,), jnp.float32, 0.5, 1.5)
    w2 = 0.2 * jax.random.normal(ks[11], (Cout, Cout, K), jnp.float32)
    cb2 = 0.1 * jax.random.normal(ks[12], (Cout,), jnp.float32)

    params = (g1, be1, m1, v1, w1, cb1, g2, be2, m2, v2, w2, cb2)

    out = dcu_forward(x, params, down_sample=down_sample)
    out = jax.block_until_ready(out)

    ref = dcu_reference(x, params, down_sample=down_sample)
    assert out.shape == ref.shape, (out.shape, ref.shape)
    max_err = float(jnp.max(jnp.abs(out - ref)))
    # All math is f32 now (VPU FMA path, no bf16 matmul operands), so the
    # tolerance is tight.
    assert max_err < 1e-3, f"max abs error {max_err}"

    print("KERNEL_OK")
</pallas_src>

<mosaic_0001>
module attributes {stable_mosaic.version = 11 : i64} {
  func.func @_dcu_kernel(%arg0: i32, %arg1: memref<8x4x16xf32, #tpu.memory_space<vmem>>, %arg2: memref<1x4x1xf32, #tpu.memory_space<vmem>>, %arg3: memref<1x4x1xf32, #tpu.memory_space<vmem>>, %arg4: memref<12x8x1xf32, #tpu.memory_space<vmem>>, %arg5: memref<1x8x1xf32, #tpu.memory_space<vmem>>, %arg6: memref<24x8x1xf32, #tpu.memory_space<vmem>>, %arg7: memref<1x8x1xf32, #tpu.memory_space<vmem>>, %arg8: memref<8x8x16xf32, #tpu.memory_space<vmem>>, %arg9: memref<8x4x18xf32, #tpu.memory_space<vmem>>, %arg10: memref<8x8x18xf32, #tpu.memory_space<vmem>>) attributes {dimension_semantics = [#tpu.dimension_semantics<parallel>], iteration_bounds = array<i64: 2>, scalar_prefetch = 0 : i64, scratch_operands = 2 : i64, tpu.core_type = #tpu.core_type<tc>, window_params = [{transform_indices = @transform_0, window_bounds = array<i64: 8, 4, 16>}, {pipeline_mode = #tpu.pipeline_mode<synchronous>, transform_indices = @transform_1, window_bounds = array<i64: 1, 4, 1>}, {pipeline_mode = #tpu.pipeline_mode<synchronous>, transform_indices = @transform_2, window_bounds = array<i64: 1, 4, 1>}, {pipeline_mode = #tpu.pipeline_mode<synchronous>, transform_indices = @transform_3, window_bounds = array<i64: 12, 8, 1>}, {pipeline_mode = #tpu.pipeline_mode<synchronous>, transform_indices = @transform_4, window_bounds = array<i64: 1, 8, 1>}, {pipeline_mode = #tpu.pipeline_mode<synchronous>, transform_indices = @transform_5, window_bounds = array<i64: 24, 8, 1>}, {pipeline_mode = #tpu.pipeline_mode<synchronous>, transform_indices = @transform_6, window_bounds = array<i64: 1, 8, 1>}, {transform_indices = @transform_7, window_bounds = array<i64: 8, 8, 16>}]} {
    %c0 = arith.constant 0 : index
    %c0_0 = arith.constant 0 : index
    %c0_1 = arith.constant 0 : index
    %0 = vector.load %arg1[%c0, %c0_0, %c0_1] : memref<8x4x16xf32, #tpu.memory_space<vmem>>, vector<8x4x16xf32>
    %c0_2 = arith.constant 0 : index
    %c0_3 = arith.constant 0 : index
    %c0_4 = arith.constant 0 : index
    %1 = vector.load %arg2[%c0_2, %c0_3, %c0_4] : memref<1x4x1xf32, #tpu.memory_space<vmem>>, vector<1x4x1xf32>
    %2 = vector.broadcast %1 : vector<1x4x1xf32> to vector<8x4x16xf32>
    %3 = arith.mulf %0, %2 : vector<8x4x16xf32>
    %c0_5 = arith.constant 0 : index
    %c0_6 = arith.constant 0 : index
    %c0_7 = arith.constant 0 : index
    %4 = vector.load %arg3[%c0_5, %c0_6, %c0_7] : memref<1x4x1xf32, #tpu.memory_space<vmem>>, vector<1x4x1xf32>
    %5 = vector.broadcast %4 : vector<1x4x1xf32> to vector<8x4x16xf32>
    %6 = arith.addf %3, %5 : vector<8x4x16xf32>
    %cst = arith.constant 0.000000e+00 : f32
    %7 = vector.broadcast %cst : f32 to vector<8x4x16xf32>
    %8 = arith.maximumf %6, %7 : vector<8x4x16xf32>
    %cst_8 = arith.constant 0.000000e+00 : f32
    %9 = vector.broadcast %cst_8 : f32 to vector<8x4x1xf32>
    %c0_9 = arith.constant 0 : index
    %c0_10 = arith.constant 0 : index
    %c0_11 = arith.constant 0 : index
    %10 = vector.load %arg9[%c0_9, %c0_10, %c0_11] : memref<8x4x18xf32, #tpu.memory_space<vmem>>, vector<8x4x1xf32>
    tpu.vector_store %arg9[%c0_9, %c0_10, %c0_11], %9 {strides = array<i32>} : memref<8x4x18xf32, #tpu.memory_space<vmem>>, vector<8x4x1xf32>,
    %c0_12 = arith.constant 0 : index
    %c0_13 = arith.constant 0 : index
    %c17 = arith.constant 17 : index
    %11 = vector.load %arg9[%c0_12, %c0_13, %c17] : memref<8x4x18xf32, #tpu.memory_space<vmem>>, vector<8x4x1xf32>
    tpu.vector_store %arg9[%c0_12, %c0_13, %c17], %9 {strides = array<i32>} : memref<8x4x18xf32, #tpu.memory_space<vmem>>, vector<8x4x1xf32>,
    %c0_14 = arith.constant 0 : index
    %c0_15 = arith.constant 0 : index
    %c1 = arith.constant 1 : index
    %12 = vector.load %arg9[%c0_14, %c0_15, %c1] : memref<8x4x18xf32, #tpu.memory_space<vmem>>, vector<8x4x16xf32>
    tpu.vector_store %arg9[%c0_14, %c0_15, %c1], %8 {strides = array<i32>} : memref<8x4x18xf32, #tpu.memory_space<vmem>>, vector<8x4x16xf32>,
    %cst_16 = arith.constant 0.000000e+00 : f32
    %13 = vector.broadcast %cst_16 : f32 to vector<8x8x16xf32>
    %c0_17 = arith.constant 0 : index
    %c0_18 = arith.constant 0 : index
    %c0_19 = arith.constant 0 : index
    %14 = vector.load %arg9[%c0_17, %c0_18, %c0_19] : memref<8x4x18xf32, #tpu.memory_space<vmem>>, vector<8x1x16xf32>
    %c0_20 = arith.constant 0 : index
    %c0_21 = arith.constant 0 : index
    %c0_22 = arith.constant 0 : index
    %15 = vector.load %arg4[%c0_20, %c0_21, %c0_22] : memref<12x8x1xf32, #tpu.memory_space<vmem>>, vector<1x8x1xf32>
    %16 = vector.shape_cast %15 : vector<1x8x1xf32> to vector<8x1xf32>
    %17 = vector.shape_cast %16 : vector<8x1xf32> to vector<1x8x1xf32>
    %18 = vector.broadcast %17 : vector<1x8x1xf32> to vector<8x8x16xf32>
    %19 = vector.broadcast %14 : vector<8x1x16xf32> to vector<8x8x16xf32>
    %20 = arith.mulf %18, %19 : vector<8x8x16xf32>
    %21 = arith.addf %13, %20 : vector<8x8x16xf32>
    %c0_23 = arith.constant 0 : index
    %c1_24 = arith.constant 1 : index
    %c0_25 = arith.constant 0 : index
    %22 = vector.load %arg9[%c0_23, %c1_24, %c0_25] : memref<8x4x18xf32, #tpu.memory_space<vmem>>, vector<8x1x16xf32>
    %c1_26 = arith.constant 1 : index
    %c0_27 = arith.constant 0 : index
    %c0_28 = arith.constant 0 : index
    %23 = vector.load %arg4[%c1_26, %c0_27, %c0_28] : memref<12x8x1xf32, #tpu.memory_space<vmem>>, vector<1x8x1xf32>
    %24 = vector.shape_cast %23 : vector<1x8x1xf32> to vector<8x1xf32>
    %25 = vector.shape_cast %24 : vector<8x1xf32> to vector<1x8x1xf32>
    %26 = vector.broadcast %25 : vector<1x8x1xf32> to vector<8x8x16xf32>
    %27 = vector.broadcast %22 : vector<8x1x16xf32> to vector<8x8x16xf32>
    %28 = arith.mulf %26, %27 : vector<8x8x16xf32>
    %29 = arith.addf %21, %28 : vector<8x8x16xf32>
    %c0_29 = arith.constant 0 : index
    %c2 = arith.constant 2 : index
    %c0_30 = arith.constant 0 : index
    %30 = vector.load %arg9[%c0_29, %c2, %c0_30] : memref<8x4x18xf32, #tpu.memory_space<vmem>>, vector<8x1x16xf32>
    %c2_31 = arith.constant 2 : index
    %c0_32 = arith.constant 0 : index
    %c0_33 = arith.constant 0 : index
    %31 = vector.load %arg4[%c2_31, %c0_32, %c0_33] : memref<12x8x1xf32, #tpu.memory_space<vmem>>, vector<1x8x1xf32>
    %32 = vector.shape_cast %31 : vector<1x8x1xf32> to vector<8x1xf32>
    %33 = vector.shape_cast %32 : vector<8x1xf32> to vector<1x8x1xf32>
    %34 = vector.broadcast %33 : vector<1x8x1xf32> to vector<8x8x16xf32>
    %35 = vector.broadcast %30 : vector<8x1x16xf32> to vector<8x8x16xf32>
    %36 = arith.mulf %34, %35 : vector<8x8x16xf32>
    %37 = arith.addf %29, %36 : vector<8x8x16xf32>
    %c0_34 = arith.constant 0 : index
    %c3 = arith.constant 3 : index
    %c0_35 = arith.constant 0 : index
    %38 = vector.load %arg9[%c0_34, %c3, %c0_35] : memref<8x4x18xf32, #tpu.memory_space<vmem>>, vector<8x1x16xf32>
    %c3_36 = arith.constant 3 : index
    %c0_37 = arith.constant 0 : index
    %c0_38 = arith.constant 0 : index
    %39 = vector.load %arg4[%c3_36, %c0_37, %c0_38] : memref<12x8x1xf32, #tpu.memory_space<vmem>>, vector<1x8x1xf32>
    %40 = vector.shape_cast %39 : vector<1x8x1xf32> to vector<8x1xf32>
    %41 = vector.shape_cast %40 : vector<8x1xf32> to vector<1x8x1xf32>
    %42 = vector.broadcast %41 : vector<1x8x1xf32> to vector<8x8x16xf32>
    %43 = vector.broadcast %38 : vector<8x1x16xf32> to vector<8x8x16xf32>
    %44 = arith.mulf %42, %43 : vector<8x8x16xf32>
    %45 = arith.addf %37, %44 : vector<8x8x16xf32>
    %c0_39 = arith.constant 0 : index
    %c0_40 = arith.constant 0 : index
    %c1_41 = arith.constant 1 : index
    %46 = vector.load %arg9[%c0_39, %c0_40, %c1_41] : memref<8x4x18xf32, #tpu.memory_space<vmem>>, vector<8x1x16xf32>
    %c4 = arith.constant 4 : index
    %c0_42 = arith.constant 0 : index
    %c0_43 = arith.constant 0 : index
    %47 = vector.load %arg4[%c4, %c0_42, %c0_43] : memref<12x8x1xf32, #tpu.memory_space<vmem>>, vector<1x8x1xf32>
    %48 = vector.shape_cast %47 : vector<1x8x1xf32> to vector<8x1xf32>
    %49 = vector.shape_cast %48 : vector<8x1xf32> to vector<1x8x1xf32>
    %50 = vector.broadcast %49 : vector<1x8x1xf32> to vector<8x8x16xf32>
    %51 = vector.broadcast %46 : vector<8x1x16xf32> to vector<8x8x16xf32>
    %52 = arith.mulf %50, %51 : vector<8x8x16xf32>
    %53 = arith.addf %45, %52 : vector<8x8x16xf32>
    %c0_44 = arith.constant 0 : index
    %c1_45 = arith.constant 1 : index
    %c1_46 = arith.constant 1 : index
    %54 = vector.load %arg9[%c0_44, %c1_45, %c1_46] : memref<8x4x18xf32, #tpu.memory_space<vmem>>, vector<8x1x16xf32>
    %c5 = arith.constant 5 : index
    %c0_47 = arith.constant 0 : index
    %c0_48 = arith.constant 0 : index
    %55 = vector.load %arg4[%c5, %c0_47, %c0_48] : memref<12x8x1xf32, #tpu.memory_space<vmem>>, vector<1x8x1xf32>
    %56 = vector.shape_cast %55 : vector<1x8x1xf32> to vector<8x1xf32>
    %57 = vector.shape_cast %56 : vector<8x1xf32> to vector<1x8x1xf32>
    %58 = vector.broadcast %57 : vector<1x8x1xf32> to vector<8x8x16xf32>
    %59 = vector.broadcast %54 : vector<8x1x16xf32> to vector<8x8x16xf32>
    %60 = arith.mulf %58, %59 : vector<8x8x16xf32>
    %61 = arith.addf %53, %60 : vector<8x8x16xf32>
    %c0_49 = arith.constant 0 : index
    %c2_50 = arith.constant 2 : index
    %c1_51 = arith.constant 1 : index
    %62 = vector.load %arg9[%c0_49, %c2_50, %c1_51] : memref<8x4x18xf32, #tpu.memory_space<vmem>>, vector<8x1x16xf32>
    %c6 = arith.constant 6 : index
    %c0_52 = arith.constant 0 : index
    %c0_53 = arith.constant 0 : index
    %63 = vector.load %arg4[%c6, %c0_52, %c0_53] : memref<12x8x1xf32, #tpu.memory_space<vmem>>, vector<1x8x1xf32>
    %64 = vector.shape_cast %63 : vector<1x8x1xf32> to vector<8x1xf32>
    %65 = vector.shape_cast %64 : vector<8x1xf32> to vector<1x8x1xf32>
    %66 = vector.broadcast %65 : vector<1x8x1xf32> to vector<8x8x16xf32>
    %67 = vector.broadcast %62 : vector<8x1x16xf32> to vector<8x8x16xf32>
    %68 = arith.mulf %66, %67 : vector<8x8x16xf32>
    %69 = arith.addf %61, %68 : vector<8x8x16xf32>
    %c0_54 = arith.constant 0 : index
    %c3_55 = arith.constant 3 : index
    %c1_56 = arith.constant 1 : index
    %70 = vector.load %arg9[%c0_54, %c3_55, %c1_56] : memref<8x4x18xf32, #tpu.memory_space<vmem>>, vector<8x1x16xf32>
    %c7 = arith.constant 7 : index
    %c0_57 = arith.constant 0 : index
    %c0_58 = arith.constant 0 : index
    %71 = vector.load %arg4[%c7, %c0_57, %c0_58] : memref<12x8x1xf32, #tpu.memory_space<vmem>>, vector<1x8x1xf32>
    %72 = vector.shape_cast %71 : vector<1x8x1xf32> to vector<8x1xf32>
    %73 = vector.shape_cast %72 : vector<8x1xf32> to vector<1x8x1xf32>
    %74 = vector.broadcast %73 : vector<1x8x1xf32> to vector<8x8x16xf32>
    %75 = vector.broadcast %70 : vector<8x1x16xf32> to vector<8x8x16xf32>
    %76 = arith.mulf %74, %75 : vector<8x8x16xf32>
    %77 = arith.addf %69, %76 : vector<8x8x16xf32>
    %c0_59 = arith.constant 0 : index
    %c0_60 = arith.constant 0 : index
    %c2_61 = arith.constant 2 : index
    %78 = vector.load %arg9[%c0_59, %c0_60, %c2_61] : memref<8x4x18xf32, #tpu.memory_space<vmem>>, vector<8x1x16xf32>
    %c8 = arith.constant 8 : index
    %c0_62 = arith.constant 0 : index
    %c0_63 = arith.constant 0 : index
    %79 = vector.load %arg4[%c8, %c0_62, %c0_63] : memref<12x8x1xf32, #tpu.memory_space<vmem>>, vector<1x8x1xf32>
    %80 = vector.shape_cast %79 : vector<1x8x1xf32> to vector<8x1xf32>
    %81 = vector.shape_cast %80 : vector<8x1xf32> to vector<1x8x1xf32>
    %82 = vector.broadcast %81 : vector<1x8x1xf32> to vector<8x8x16xf32>
    %83 = vector.broadcast %78 : vector<8x1x16xf32> to vector<8x8x16xf32>
    %84 = arith.mulf %82, %83 : vector<8x8x16xf32>
    %85 = arith.addf %77, %84 : vector<8x8x16xf32>
    %c0_64 = arith.constant 0 : index
    %c1_65 = arith.constant 1 : index
    %c2_66 = arith.constant 2 : index
    %86 = vector.load %arg9[%c0_64, %c1_65, %c2_66] : memref<8x4x18xf32, #tpu.memory_space<vmem>>, vector<8x1x16xf32>
    %c9 = arith.constant 9 : index
    %c0_67 = arith.constant 0 : index
    %c0_68 = arith.constant 0 : index
    %87 = vector.load %arg4[%c9, %c0_67, %c0_68] : memref<12x8x1xf32, #tpu.memory_space<vmem>>, vector<1x8x1xf32>
    %88 = vector.shape_cast %87 : vector<1x8x1xf32> to vector<8x1xf32>
    %89 = vector.shape_cast %88 : vector<8x1xf32> to vector<1x8x1xf32>
    %90 = vector.broadcast %89 : vector<1x8x1xf32> to vector<8x8x16xf32>
    %91 = vector.broadcast %86 : vector<8x1x16xf32> to vector<8x8x16xf32>
    %92 = arith.mulf %90, %91 : vector<8x8x16xf32>
    %93 = arith.addf %85, %92 : vector<8x8x16xf32>
    %c0_69 = arith.constant 0 : index
    %c2_70 = arith.constant 2 : index
    %c2_71 = arith.constant 2 : index
    %94 = vector.load %arg9[%c0_69, %c2_70, %c2_71] : memref<8x4x18xf32, #tpu.memory_space<vmem>>, vector<8x1x16xf32>
    %c10 = arith.constant 10 : index
    %c0_72 = arith.constant 0 : index
    %c0_73 = arith.constant 0 : index
    %95 = vector.load %arg4[%c10, %c0_72, %c0_73] : memref<12x8x1xf32, #tpu.memory_space<vmem>>, vector<1x8x1xf32>
    %96 = vector.shape_cast %95 : vector<1x8x1xf32> to vector<8x1xf32>
    %97 = vector.shape_cast %96 : vector<8x1xf32> to vector<1x8x1xf32>
    %98 = vector.broadcast %97 : vector<1x8x1xf32> to vector<8x8x16xf32>
    %99 = vector.broadcast %94 : vector<8x1x16xf32> to vector<8x8x16xf32>
    %100 = arith.mulf %98, %99 : vector<8x8x16xf32>
    %101 = arith.addf %93, %100 : vector<8x8x16xf32>
    %c0_74 = arith.constant 0 : index
    %c3_75 = arith.constant 3 : index
    %c2_76 = arith.constant 2 : index
    %102 = vector.load %arg9[%c0_74, %c3_75, %c2_76] : memref<8x4x18xf32, #tpu.memory_space<vmem>>, vector<8x1x16xf32>
    %c11 = arith.constant 11 : index
    %c0_77 = arith.constant 0 : index
    %c0_78 = arith.constant 0 : index
    %103 = vector.load %arg4[%c11, %c0_77, %c0_78] : memref<12x8x1xf32, #tpu.memory_space<vmem>>, vector<1x8x1xf32>
    %104 = vector.shape_cast %103 : vector<1x8x1xf32> to vector<8x1xf32>
    %105 = vector.shape_cast %104 : vector<8x1xf32> to vector<1x8x1xf32>
    %106 = vector.broadcast %105 : vector<1x8x1xf32> to vector<8x8x16xf32>
    %107 = vector.broadcast %102 : vector<8x1x16xf32> to vector<8x8x16xf32>
    %108 = arith.mulf %106, %107 : vector<8x8x16xf32>
    %109 = arith.addf %101, %108 : vector<8x8x16xf32>
    %c0_79 = arith.constant 0 : index
    %c0_80 = arith.constant 0 : index
    %c0_81 = arith.constant 0 : index
    %110 = vector.load %arg5[%c0_79, %c0_80, %c0_81] : memref<1x8x1xf32, #tpu.memory_space<vmem>>, vector<1x8x1xf32>
    %111 = vector.broadcast %110 : vector<1x8x1xf32> to vector<8x8x16xf32>
    %112 = arith.addf %109, %111 : vector<8x8x16xf32>
    %cst_82 = arith.constant 0.000000e+00 : f32
    %113 = vector.broadcast %cst_82 : f32 to vector<8x8x16xf32>
    %114 = arith.maximumf %112, %113 : vector<8x8x16xf32>
    %cst_83 = arith.constant 0.000000e+00 : f32
    %115 = vector.broadcast %cst_83 : f32 to vector<8x8x1xf32>
    %c0_84 = arith.constant 0 : index
    %c0_85 = arith.constant 0 : index
    %c0_86 = arith.constant 0 : index
    %116 = vector.load %arg10[%c0_84, %c0_85, %c0_86] : memref<8x8x18xf32, #tpu.memory_space<vmem>>, vector<8x8x1xf32>
    tpu.vector_store %arg10[%c0_84, %c0_85, %c0_86], %115 {strides = array<i32>} : memref<8x8x18xf32, #tpu.memory_space<vmem>>, vector<8x8x1xf32>,
    %c0_87 = arith.constant 0 : index
    %c0_88 = arith.constant 0 : index
    %c17_89 = arith.constant 17 : index
    %117 = vector.load %arg10[%c0_87, %c0_88, %c17_89] : memref<8x8x18xf32, #tpu.memory_space<vmem>>, vector<8x8x1xf32>
    tpu.vector_store %arg10[%c0_87, %c0_88, %c17_89], %115 {strides = array<i32>} : memref<8x8x18xf32, #tpu.memory_space<vmem>>, vector<8x8x1xf32>,
    %c0_90 = arith.constant 0 : index
    %c0_91 = arith.constant 0 : index
    %c1_92 = arith.constant 1 : index
    %118 = vector.load %arg10[%c0_90, %c0_91, %c1_92] : memref<8x8x18xf32, #tpu.memory_space<vmem>>, vector<8x8x16xf32>
    tpu.vector_store %arg10[%c0_90, %c0_91, %c1_92], %114 {strides = array<i32>} : memref<8x8x18xf32, #tpu.memory_space<vmem>>, vector<8x8x16xf32>,
    %cst_93 = arith.constant 0.000000e+00 : f32
    %119 = vector.broadcast %cst_93 : f32 to vector<8x8x16xf32>
    %c0_94 = arith.constant 0 : index
    %c0_95 = arith.constant 0 : index
    %c0_96 = arith.constant 0 : index
    %120 = vector.load %arg10[%c0_94, %c0_95, %c0_96] : memref<8x8x18xf32, #tpu.memory_space<vmem>>, vector<8x1x16xf32>
    %c0_97 = arith.constant 0 : index
    %c0_98 = arith.constant 0 : index
    %c0_99 = arith.constant 0 : index
    %121 = vector.load %arg6[%c0_97, %c0_98, %c0_99] : memref<24x8x1xf32, #tpu.memory_space<vmem>>, vector<1x8x1xf32>
    %122 = vector.shape_cast %121 : vector<1x8x1xf32> to vector<8x1xf32>
    %123 = vector.shape_cast %122 : vector<8x1xf32> to vector<1x8x1xf32>
    %124 = vector.broadcast %123 : vector<1x8x1xf32> to vector<8x8x16xf32>
    %125 = vector.broadcast %120 : vector<8x1x16xf32> to vector<8x8x16xf32>
    %126 = arith.mulf %124, %125 : vector<8x8x16xf32>
    %127 = arith.addf %119, %126 : vector<8x8x16xf32>
    %c0_100 = arith.constant 0 : index
    %c1_101 = arith.constant 1 : index
    %c0_102 = arith.constant 0 : index
    %128 = vector.load %arg10[%c0_100, %c1_101, %c0_102] : memref<8x8x18xf32, #tpu.memory_space<vmem>>, vector<8x1x16xf32>
    %c1_103 = arith.constant 1 : index
    %c0_104 = arith.constant 0 : index
    %c0_105 = arith.constant 0 : index
    %129 = vector.load %arg6[%c1_103, %c0_104, %c0_105] : memref<24x8x1xf32, #tpu.memory_space<vmem>>, vector<1x8x1xf32>
    %130 = vector.shape_cast %129 : vector<1x8x1xf32> to vector<8x1xf32>
    %131 = vector.shape_cast %130 : vector<8x1xf32> to vector<1x8x1xf32>
    %132 = vector.broadcast %131 : vector<1x8x1xf32> to vector<8x8x16xf32>
    %133 = vector.broadcast %128 : vector<8x1x16xf32> to vector<8x8x16xf32>
    %134 = arith.mulf %132, %133 : vector<8x8x16xf32>
    %135 = arith.addf %127, %134 : vector<8x8x16xf32>
    %c0_106 = arith.constant 0 : index
    %c2_107 = arith.constant 2 : index
    %c0_108 = arith.constant 0 : index
    %136 = vector.load %arg10[%c0_106, %c2_107, %c0_108] : memref<8x8x18xf32, #tpu.memory_space<vmem>>, vector<8x1x16xf32>
    %c2_109 = arith.constant 2 : index
    %c0_110 = arith.constant 0 : index
    %c0_111 = arith.constant 0 : index
    %137 = vector.load %arg6[%c2_109, %c0_110, %c0_111] : memref<24x8x1xf32, #tpu.memory_space<vmem>>, vector<1x8x1xf32>
    %138 = vector.shape_cast %137 : vector<1x8x1xf32> to vector<8x1xf32>
    %139 = vector.shape_cast %138 : vector<8x1xf32> to vector<1x8x1xf32>
    %140 = vector.broadcast %139 : vector<1x8x1xf32> to vector<8x8x16xf32>
    %141 = vector.broadcast %136 : vector<8x1x16xf32> to vector<8x8x16xf32>
    %142 = arith.mulf %140, %141 : vector<8x8x16xf32>
    %143 = arith.addf %135, %142 : vector<8x8x16xf32>
    %c0_112 = arith.constant 0 : index
    %c3_113 = arith.constant 3 : index
    %c0_114 = arith.constant 0 : index
    %144 = vector.load %arg10[%c0_112, %c3_113, %c0_114] : memref<8x8x18xf32, #tpu.memory_space<vmem>>, vector<8x1x16xf32>
    %c3_115 = arith.constant 3 : index
    %c0_116 = arith.constant 0 : index
    %c0_117 = arith.constant 0 : index
    %145 = vector.load %arg6[%c3_115, %c0_116, %c0_117] : memref<24x8x1xf32, #tpu.memory_space<vmem>>, vector<1x8x1xf32>
    %146 = vector.shape_cast %145 : vector<1x8x1xf32> to vector<8x1xf32>
    %147 = vector.shape_cast %146 : vector<8x1xf32> to vector<1x8x1xf32>
    %148 = vector.broadcast %147 : vector<1x8x1xf32> to vector<8x8x16xf32>
    %149 = vector.broadcast %144 : vector<8x1x16xf32> to vector<8x8x16xf32>
    %150 = arith.mulf %148, %149 : vector<8x8x16xf32>
    %151 = arith.addf %143, %150 : vector<8x8x16xf32>
    %c0_118 = arith.constant 0 : index
    %c4_119 = arith.constant 4 : index
    %c0_120 = arith.constant 0 : index
    %152 = vector.load %arg10[%c0_118, %c4_119, %c0_120] : memref<8x8x18xf32, #tpu.memory_space<vmem>>, vector<8x1x16xf32>
    %c4_121 = arith.constant 4 : index
    %c0_122 = arith.constant 0 : index
    %c0_123 = arith.constant 0 : index
    %153 = vector.load %arg6[%c4_121, %c0_122, %c0_123] : memref<24x8x1xf32, #tpu.memory_space<vmem>>, vector<1x8x1xf32>
    %154 = vector.shape_cast %153 : vector<1x8x1xf32> to vector<8x1xf32>
    %155 = vector.shape_cast %154 : vector<8x1xf32> to vector<1x8x1xf32>
    %156 = vector.broadcast %155 : vector<1x8x1xf32> to vector<8x8x16xf32>
    %157 = vector.broadcast %152 : vector<8x1x16xf32> to vector<8x8x16xf32>
    %158 = arith.mulf %156, %157 : vector<8x8x16xf32>
    %159 = arith.addf %151, %158 : vector<8x8x16xf32>
    %c0_124 = arith.constant 0 : index
    %c5_125 = arith.constant 5 : index
    %c0_126 = arith.constant 0 : index
    %160 = vector.load %arg10[%c0_124, %c5_125, %c0_126] : memref<8x8x18xf32, #tpu.memory_space<vmem>>, vector<8x1x16xf32>
    %c5_127 = arith.constant 5 : index
    %c0_128 = arith.constant 0 : index
    %c0_129 = arith.constant 0 : index
    %161 = vector.load %arg6[%c5_127, %c0_128, %c0_129] : memref<24x8x1xf32, #tpu.memory_space<vmem>>, vector<1x8x1xf32>
    %162 = vector.shape_cast %161 : vector<1x8x1xf32> to vector<8x1xf32>
    %163 = vector.shape_cast %162 : vector<8x1xf32> to vector<1x8x1xf32>
    %164 = vector.broadcast %163 : vector<1x8x1xf32> to vector<8x8x16xf32>
    %165 = vector.broadcast %160 : vector<8x1x16xf32> to vector<8x8x16xf32>
    %166 = arith.mulf %164, %165 : vector<8x8x16xf32>
    %167 = arith.addf %159, %166 : vector<8x8x16xf32>
    %c0_130 = arith.constant 0 : index
    %c6_131 = arith.constant 6 : index
    %c0_132 = arith.constant 0 : index
    %168 = vector.load %arg10[%c0_130, %c6_131, %c0_132] : memref<8x8x18xf32, #tpu.memory_space<vmem>>, vector<8x1x16xf32>
    %c6_133 = arith.constant 6 : index
    %c0_134 = arith.constant 0 : index
    %c0_135 = arith.constant 0 : index
    %169 = vector.load %arg6[%c6_133, %c0_134, %c0_135] : memref<24x8x1xf32, #tpu.memory_space<vmem>>, vector<1x8x1xf32>
    %170 = vector.shape_cast %169 : vector<1x8x1xf32> to vector<8x1xf32>
    %171 = vector.shape_cast %170 : vector<8x1xf32> to vector<1x8x1xf32>
    %172 = vector.broadcast %171 : vector<1x8x1xf32> to vector<8x8x16xf32>
    %173 = vector.broadcast %168 : vector<8x1x16xf32> to vector<8x8x16xf32>
    %174 = arith.mulf %172, %173 : vector<8x8x16xf32>
    %175 = arith.addf %167, %174 : vector<8x8x16xf32>
    %c0_136 = arith.constant 0 : index
    %c7_137 = arith.constant 7 : index
    %c0_138 = arith.constant 0 : index
    %176 = vector.load %arg10[%c0_136, %c7_137, %c0_138] : memref<8x8x18xf32, #tpu.memory_space<vmem>>, vector<8x1x16xf32>
    %c7_139 = arith.constant 7 : index
    %c0_140 = arith.constant 0 : index
    %c0_141 = arith.constant 0 : index
    %177 = vector.load %arg6[%c7_139, %c0_140, %c0_141] : memref<24x8x1xf32, #tpu.memory_space<vmem>>, vector<1x8x1xf32>
    %178 = vector.shape_cast %177 : vector<1x8x1xf32> to vector<8x1xf32>
    %179 = vector.shape_cast %178 : vector<8x1xf32> to vector<1x8x1xf32>
    %180 = vector.broadcast %179 : vector<1x8x1xf32> to vector<8x8x16xf32>
    %181 = vector.broadcast %176 : vector<8x1x16xf32> to vector<8x8x16xf32>
    %182 = arith.mulf %180, %181 : vector<8x8x16xf32>
    %183 = arith.addf %175, %182 : vector<8x8x16xf32>
    %c0_142 = arith.constant 0 : index
    %c0_143 = arith.constant 0 : index
    %c1_144 = arith.constant 1 : index
    %184 = vector.load %arg10[%c0_142, %c0_143, %c1_144] : memref<8x8x18xf32, #tpu.memory_space<vmem>>, vector<8x1x16xf32>
    %c8_145 = arith.constant 8 : index
    %c0_146 = arith.constant 0 : index
    %c0_147 = arith.constant 0 : index
    %185 = vector.load %arg6[%c8_145, %c0_146, %c0_147] : memref<24x8x1xf32, #tpu.memory_space<vmem>>, vector<1x8x1xf32>
    %186 = vector.shape_cast %185 : vector<1x8x1xf32> to vector<8x1xf32>
    %187 = vector.shape_cast %186 : vector<8x1xf32> to vector<1x8x1xf32>
    %188 = vector.broadcast %187 : vector<1x8x1xf32> to vector<8x8x16xf32>
    %189 = vector.broadcast %184 : vector<8x1x16xf32> to vector<8x8x16xf32>
    %190 = arith.mulf %188, %189 : vector<8x8x16xf32>
    %191 = arith.addf %183, %190 : vector<8x8x16xf32>
    %c0_148 = arith.constant 0 : index
    %c1_149 = arith.constant 1 : index
    %c1_150 = arith.constant 1 : index
    %192 = vector.load %arg10[%c0_148, %c1_149, %c1_150] : memref<8x8x18xf32, #tpu.memory_space<vmem>>, vector<8x1x16xf32>
    %c9_151 = arith.constant 9 : index
    %c0_152 = arith.constant 0 : index
    %c0_153 = arith.constant 0 : index
    %193 = vector.load %arg6[%c9_151, %c0_152, %c0_153] : memref<24x8x1xf32, #tpu.memory_space<vmem>>, vector<1x8x1xf32>
    %194 = vector.shape_cast %193 : vector<1x8x1xf32> to vector<8x1xf32>
    %195 = vector.shape_cast %194 : vector<8x1xf32> to vector<1x8x1xf32>
    %196 = vector.broadcast %195 : vector<1x8x1xf32> to vector<8x8x16xf32>
    %197 = vector.broadcast %192 : vector<8x1x16xf32> to vector<8x8x16xf32>
    %198 = arith.mulf %196, %197 : vector<8x8x16xf32>
    %199 = arith.addf %191, %198 : vector<8x8x16xf32>
    %c0_154 = arith.constant 0 : index
    %c2_155 = arith.constant 2 : index
    %c1_156 = arith.constant 1 : index
    %200 = vector.load %arg10[%c0_154, %c2_155, %c1_156] : memref<8x8x18xf32, #tpu.memory_space<vmem>>, vector<8x1x16xf32>
    %c10_157 = arith.constant 10 : index
    %c0_158 = arith.constant 0 : index
    %c0_159 = arith.constant 0 : index
    %201 = vector.load %arg6[%c10_157, %c0_158, %c0_159] : memref<24x8x1xf32, #tpu.memory_space<vmem>>, vector<1x8x1xf32>
    %202 = vector.shape_cast %201 : vector<1x8x1xf32> to vector<8x1xf32>
    %203 = vector.shape_cast %202 : vector<8x1xf32> to vector<1x8x1xf32>
    %204 = vector.broadcast %203 : vector<1x8x1xf32> to vector<8x8x16xf32>
    %205 = vector.broadcast %200 : vector<8x1x16xf32> to vector<8x8x16xf32>
    %206 = arith.mulf %204, %205 : vector<8x8x16xf32>
    %207 = arith.addf %199, %206 : vector<8x8x16xf32>
    %c0_160 = arith.constant 0 : index
    %c3_161 = arith.constant 3 : index
    %c1_162 = arith.constant 1 : index
    %208 = vector.load %arg10[%c0_160, %c3_161, %c1_162] : memref<8x8x18xf32, #tpu.memory_space<vmem>>, vector<8x1x16xf32>
    %c11_163 = arith.constant 11 : index
    %c0_164 = arith.constant 0 : index
    %c0_165 = arith.constant 0 : index
    %209 = vector.load %arg6[%c11_163, %c0_164, %c0_165] : memref<24x8x1xf32, #tpu.memory_space<vmem>>, vector<1x8x1xf32>
    %210 = vector.shape_cast %209 : vector<1x8x1xf32> to vector<8x1xf32>
    %211 = vector.shape_cast %210 : vector<8x1xf32> to vector<1x8x1xf32>
    %212 = vector.broadcast %211 : vector<1x8x1xf32> to vector<8x8x16xf32>
    %213 = vector.broadcast %208 : vector<8x1x16xf32> to vector<8x8x16xf32>
    %214 = arith.mulf %212, %213 : vector<8x8x16xf32>
    %215 = arith.addf %207, %214 : vector<8x8x16xf32>
    %c0_166 = arith.constant 0 : index
    %c4_167 = arith.constant 4 : index
    %c1_168 = arith.constant 1 : index
    %216 = vector.load %arg10[%c0_166, %c4_167, %c1_168] : memref<8x8x18xf32, #tpu.memory_space<vmem>>, vector<8x1x16xf32>
    %c12 = arith.constant 12 : index
    %c0_169 = arith.constant 0 : index
    %c0_170 = arith.constant 0 : index
    %217 = vector.load %arg6[%c12, %c0_169, %c0_170] : memref<24x8x1xf32, #tpu.memory_space<vmem>>, vector<1x8x1xf32>
    %218 = vector.shape_cast %217 : vector<1x8x1xf32> to vector<8x1xf32>
    %219 = vector.shape_cast %218 : vector<8x1xf32> to vector<1x8x1xf32>
    %220 = vector.broadcast %219 : vector<1x8x1xf32> to vector<8x8x16xf32>
    %221 = vector.broadcast %216 : vector<8x1x16xf32> to vector<8x8x16xf32>
    %222 = arith.mulf %220, %221 : vector<8x8x16xf32>
    %223 = arith.addf %215, %222 : vector<8x8x16xf32>
    %c0_171 = arith.constant 0 : index
    %c5_172 = arith.constant 5 : index
    %c1_173 = arith.constant 1 : index
    %224 = vector.load %arg10[%c0_171, %c5_172, %c1_173] : memref<8x8x18xf32, #tpu.memory_space<vmem>>, vector<8x1x16xf32>
    %c13 = arith.constant 13 : index
    %c0_174 = arith.constant 0 : index
    %c0_175 = arith.constant 0 : index
    %225 = vector.load %arg6[%c13, %c0_174, %c0_175] : memref<24x8x1xf32, #tpu.memory_space<vmem>>, vector<1x8x1xf32>
    %226 = vector.shape_cast %225 : vector<1x8x1xf32> to vector<8x1xf32>
    %227 = vector.shape_cast %226 : vector<8x1xf32> to vector<1x8x1xf32>
    %228 = vector.broadcast %227 : vector<1x8x1xf32> to vector<8x8x16xf32>
    %229 = vector.broadcast %224 : vector<8x1x16xf32> to vector<8x8x16xf32>
    %230 = arith.mulf %228, %229 : vector<8x8x16xf32>
    %231 = arith.addf %223, %230 : vector<8x8x16xf32>
    %c0_176 = arith.constant 0 : index
    %c6_177 = arith.constant 6 : index
    %c1_178 = arith.constant 1 : index
    %232 = vector.load %arg10[%c0_176, %c6_177, %c1_178] : memref<8x8x18xf32, #tpu.memory_space<vmem>>, vector<8x1x16xf32>
    %c14 = arith.constant 14 : index
    %c0_179 = arith.constant 0 : index
    %c0_180 = arith.constant 0 : index
    %233 = vector.load %arg6[%c14, %c0_179, %c0_180] : memref<24x8x1xf32, #tpu.memory_space<vmem>>, vector<1x8x1xf32>
    %234 = vector.shape_cast %233 : vector<1x8x1xf32> to vector<8x1xf32>
    %235 = vector.shape_cast %234 : vector<8x1xf32> to vector<1x8x1xf32>
    %236 = vector.broadcast %235 : vector<1x8x1xf32> to vector<8x8x16xf32>
    %237 = vector.broadcast %232 : vector<8x1x16xf32> to vector<8x8x16xf32>
    %238 = arith.mulf %236, %237 : vector<8x8x16xf32>
    %239 = arith.addf %231, %238 : vector<8x8x16xf32>
    %c0_181 = arith.constant 0 : index
    %c7_182 = arith.constant 7 : index
    %c1_183 = arith.constant 1 : index
    %240 = vector.load %arg10[%c0_181, %c7_182, %c1_183] : memref<8x8x18xf32, #tpu.memory_space<vmem>>, vector<8x1x16xf32>
    %c15 = arith.constant 15 : index
    %c0_184 = arith.constant 0 : index
    %c0_185 = arith.constant 0 : index
    %241 = vector.load %arg6[%c15, %c0_184, %c0_185] : memref<24x8x1xf32, #tpu.memory_space<vmem>>, vector<1x8x1xf32>
    %242 = vector.shape_cast %241 : vector<1x8x1xf32> to vector<8x1xf32>
    %243 = vector.shape_cast %242 : vector<8x1xf32> to vector<1x8x1xf32>
    %244 = vector.broadcast %243 : vector<1x8x1xf32> to vector<8x8x16xf32>
    %245 = vector.broadcast %240 : vector<8x1x16xf32> to vector<8x8x16xf32>
    %246 = arith.mulf %244, %245 : vector<8x8x16xf32>
    %247 = arith.addf %239, %246 : vector<8x8x16xf32>
    %c0_186 = arith.constant 0 : index
    %c0_187 = arith.constant 0 : index
    %c2_188 = arith.constant 2 : index
    %248 = vector.load %arg10[%c0_186, %c0_187, %c2_188] : memref<8x8x18xf32, #tpu.memory_space<vmem>>, vector<8x1x16xf32>
    %c16 = arith.constant 16 : index
    %c0_189 = arith.constant 0 : index
    %c0_190 = arith.constant 0 : index
    %249 = vector.load %arg6[%c16, %c0_189, %c0_190] : memref<24x8x1xf32, #tpu.memory_space<vmem>>, vector<1x8x1xf32>
    %250 = vector.shape_cast %249 : vector<1x8x1xf32> to vector<8x1xf32>
    %251 = vector.shape_cast %250 : vector<8x1xf32> to vector<1x8x1xf32>
    %252 = vector.broadcast %251 : vector<1x8x1xf32> to vector<8x8x16xf32>
    %253 = vector.broadcast %248 : vector<8x1x16xf32> to vector<8x8x16xf32>
    %254 = arith.mulf %252, %253 : vector<8x8x16xf32>
    %255 = arith.addf %247, %254 : vector<8x8x16xf32>
    %c0_191 = arith.constant 0 : index
    %c1_192 = arith.constant 1 : index
    %c2_193 = arith.constant 2 : index
    %256 = vector.load %arg10[%c0_191, %c1_192, %c2_193] : memref<8x8x18xf32, #tpu.memory_space<vmem>>, vector<8x1x16xf32>
    %c17_194 = arith.constant 17 : index
    %c0_195 = arith.constant 0 : index
    %c0_196 = arith.constant 0 : index
    %257 = vector.load %arg6[%c17_194, %c0_195, %c0_196] : memref<24x8x1xf32, #tpu.memory_space<vmem>>, vector<1x8x1xf32>
    %258 = vector.shape_cast %257 : vector<1x8x1xf32> to vector<8x1xf32>
    %259 = vector.shape_cast %258 : vector<8x1xf32> to vector<1x8x1xf32>
    %260 = vector.broadcast %259 : vector<1x8x1xf32> to vector<8x8x16xf32>
    %261 = vector.broadcast %256 : vector<8x1x16xf32> to vector<8x8x16xf32>
    %262 = arith.mulf %260, %261 : vector<8x8x16xf32>
    %263 = arith.addf %255, %262 : vector<8x8x16xf32>
    %c0_197 = arith.constant 0 : index
    %c2_198 = arith.constant 2 : index
    %c2_199 = arith.constant 2 : index
    %264 = vector.load %arg10[%c0_197, %c2_198, %c2_199] : memref<8x8x18xf32, #tpu.memory_space<vmem>>, vector<8x1x16xf32>
    %c18 = arith.constant 18 : index
    %c0_200 = arith.constant 0 : index
    %c0_201 = arith.constant 0 : index
    %265 = vector.load %arg6[%c18, %c0_200, %c0_201] : memref<24x8x1xf32, #tpu.memory_space<vmem>>, vector<1x8x1xf32>
    %266 = vector.shape_cast %265 : vector<1x8x1xf32> to vector<8x1xf32>
    %267 = vector.shape_cast %266 : vector<8x1xf32> to vector<1x8x1xf32>
    %268 = vector.broadcast %267 : vector<1x8x1xf32> to vector<8x8x16xf32>
    %269 = vector.broadcast %264 : vector<8x1x16xf32> to vector<8x8x16xf32>
    %270 = arith.mulf %268, %269 : vector<8x8x16xf32>
    %271 = arith.addf %263, %270 : vector<8x8x16xf32>
    %c0_202 = arith.constant 0 : index
    %c3_203 = arith.constant 3 : index
    %c2_204 = arith.constant 2 : index
    %272 = vector.load %arg10[%c0_202, %c3_203, %c2_204] : memref<8x8x18xf32, #tpu.memory_space<vmem>>, vector<8x1x16xf32>
    %c19 = arith.constant 19 : index
    %c0_205 = arith.constant 0 : index
    %c0_206 = arith.constant 0 : index
    %273 = vector.load %arg6[%c19, %c0_205, %c0_206] : memref<24x8x1xf32, #tpu.memory_space<vmem>>, vector<1x8x1xf32>
    %274 = vector.shape_cast %273 : vector<1x8x1xf32> to vector<8x1xf32>
    %275 = vector.shape_cast %274 : vector<8x1xf32> to vector<1x8x1xf32>
    %276 = vector.broadcast %275 : vector<1x8x1xf32> to vector<8x8x16xf32>
    %277 = vector.broadcast %272 : vector<8x1x16xf32> to vector<8x8x16xf32>
    %278 = arith.mulf %276, %277 : vector<8x8x16xf32>
    %279 = arith.addf %271, %278 : vector<8x8x16xf32>
    %c0_207 = arith.constant 0 : index
    %c4_208 = arith.constant 4 : index
    %c2_209 = arith.constant 2 : index
    %280 = vector.load %arg10[%c0_207, %c4_208, %c2_209] : memref<8x8x18xf32, #tpu.memory_space<vmem>>, vector<8x1x16xf32>
    %c20 = arith.constant 20 : index
    %c0_210 = arith.constant 0 : index
    %c0_211 = arith.constant 0 : index
    %281 = vector.load %arg6[%c20, %c0_210, %c0_211] : memref<24x8x1xf32, #tpu.memory_space<vmem>>, vector<1x8x1xf32>
    %282 = vector.shape_cast %281 : vector<1x8x1xf32> to vector<8x1xf32>
    %283 = vector.shape_cast %282 : vector<8x1xf32> to vector<1x8x1xf32>
    %284 = vector.broadcast %283 : vector<1x8x1xf32> to vector<8x8x16xf32>
    %285 = vector.broadcast %280 : vector<8x1x16xf32> to vector<8x8x16xf32>
    %286 = arith.mulf %284, %285 : vector<8x8x16xf32>
    %287 = arith.addf %279, %286 : vector<8x8x16xf32>
    %c0_212 = arith.constant 0 : index
    %c5_213 = arith.constant 5 : index
    %c2_214 = arith.constant 2 : index
    %288 = vector.load %arg10[%c0_212, %c5_213, %c2_214] : memref<8x8x18xf32, #tpu.memory_space<vmem>>, vector<8x1x16xf32>
    %c21 = arith.constant 21 : index
    %c0_215 = arith.constant 0 : index
    %c0_216 = arith.constant 0 : index
    %289 = vector.load %arg6[%c21, %c0_215, %c0_216] : memref<24x8x1xf32, #tpu.memory_space<vmem>>, vector<1x8x1xf32>
    %290 = vector.shape_cast %289 : vector<1x8x1xf32> to vector<8x1xf32>
    %291 = vector.shape_cast %290 : vector<8x1xf32> to vector<1x8x1xf32>
    %292 = vector.broadcast %291 : vector<1x8x1xf32> to vector<8x8x16xf32>
    %293 = vector.broadcast %288 : vector<8x1x16xf32> to vector<8x8x16xf32>
    %294 = arith.mulf %292, %293 : vector<8x8x16xf32>
    %295 = arith.addf %287, %294 : vector<8x8x16xf32>
    %c0_217 = arith.constant 0 : index
    %c6_218 = arith.constant 6 : index
    %c2_219 = arith.constant 2 : index
    %296 = vector.load %arg10[%c0_217, %c6_218, %c2_219] : memref<8x8x18xf32, #tpu.memory_space<vmem>>, vector<8x1x16xf32>
    %c22 = arith.constant 22 : index
    %c0_220 = arith.constant 0 : index
    %c0_221 = arith.constant 0 : index
    %297 = vector.load %arg6[%c22, %c0_220, %c0_221] : memref<24x8x1xf32, #tpu.memory_space<vmem>>, vector<1x8x1xf32>
    %298 = vector.shape_cast %297 : vector<1x8x1xf32> to vector<8x1xf32>
    %299 = vector.shape_cast %298 : vector<8x1xf32> to vector<1x8x1xf32>
    %300 = vector.broadcast %299 : vector<1x8x1xf32> to vector<8x8x16xf32>
    %301 = vector.broadcast %296 : vector<8x1x16xf32> to vector<8x8x16xf32>
    %302 = arith.mulf %300, %301 : vector<8x8x16xf32>
    %303 = arith.addf %295, %302 : vector<8x8x16xf32>
    %c0_222 = arith.constant 0 : index
    %c7_223 = arith.constant 7 : index
    %c2_224 = arith.constant 2 : index
    %304 = vector.load %arg10[%c0_222, %c7_223, %c2_224] : memref<8x8x18xf32, #tpu.memory_space<vmem>>, vector<8x1x16xf32>
    %c23 = arith.constant 23 : index
    %c0_225 = arith.constant 0 : index
    %c0_226 = arith.constant 0 : index
    %305 = vector.load %arg6[%c23, %c0_225, %c0_226] : memref<24x8x1xf32, #tpu.memory_space<vmem>>, vector<1x8x1xf32>
    %306 = vector.shape_cast %305 : vector<1x8x1xf32> to vector<8x1xf32>
    %307 = vector.shape_cast %306 : vector<8x1xf32> to vector<1x8x1xf32>
    %308 = vector.broadcast %307 : vector<1x8x1xf32> to vector<8x8x16xf32>
    %309 = vector.broadcast %304 : vector<8x1x16xf32> to vector<8x8x16xf32>
    %310 = arith.mulf %308, %309 : vector<8x8x16xf32>
    %311 = arith.addf %303, %310 : vector<8x8x16xf32>
    %c0_227 = arith.constant 0 : index
    %c0_228 = arith.constant 0 : index
    %c0_229 = arith.constant 0 : index
    %312 = vector.load %arg7[%c0_227, %c0_228, %c0_229] : memref<1x8x1xf32, #tpu.memory_space<vmem>>, vector<1x8x1xf32>
    %313 = vector.broadcast %312 : vector<1x8x1xf32> to vector<8x8x16xf32>
    %314 = arith.addf %311, %313 : vector<8x8x16xf32>
    %c0_230 = arith.constant 0 : index
    %c0_231 = arith.constant 0 : index
    %c0_232 = arith.constant 0 : index
    %315 = vector.load %arg8[%c0_230, %c0_231, %c0_232] : memref<8x8x16xf32, #tpu.memory_space<vmem>>, vector<8x8x16xf32>
    tpu.vector_store %arg8[%c0_230, %c0_231, %c0_232], %314 {strides = array<i32>} : memref<8x8x16xf32, #tpu.memory_space<vmem>>, vector<8x8x16xf32>,
    return
  }
  func.func @transform_0(%arg0: i32) -> (i32, i32, i32) {
    %c0_i32 = arith.constant 0 : i32
    %c0_i32_0 = arith.constant 0 : i32
    %c0_i32_1 = arith.constant 0 : i32
    return %arg0, %c0_i32, %c0_i32_0 : i32, i32, i32
  }
  func.func @transform_1(%arg0: i32) -> (i32, i32, i32) {
    %c0_i32 = arith.constant 0 : i32
    %c0_i32_0 = arith.constant 0 : i32
    %c0_i32_1 = arith.constant 0 : i32
    %c0_i32_2 = arith.constant 0 : i32
    return %c0_i32, %c0_i32_0, %c0_i32_1 : i32, i32, i32
  }
  func.func @transform_2(%arg0: i32) -> (i32, i32, i32) {
    %c0_i32 = arith.constant 0 : i32
    %c0_i32_0 = arith.constant 0 : i32
    %c0_i32_1 = arith.constant 0 : i32
    %c0_i32_2 = arith.constant 0 : i32
    return %c0_i32, %c0_i32_0, %c0_i32_1 : i32, i32, i32
  }
  func.func @transform_3(%arg0: i32) -> (i32, i32, i32) {
    %c0_i32 = arith.constant 0 : i32
    %c0_i32_0 = arith.constant 0 : i32
    %c0_i32_1 = arith.constant 0 : i32
    %c0_i32_2 = arith.constant 0 : i32
    return %c0_i32, %c0_i32_0, %c0_i32_1 : i32, i32, i32
  }
  func.func @transform_4(%arg0: i32) -> (i32, i32, i32) {
    %c0_i32 = arith.constant 0 : i32
    %c0_i32_0 = arith.constant 0 : i32
    %c0_i32_1 = arith.constant 0 : i32
    %c0_i32_2 = arith.constant 0 : i32
    return %c0_i32, %c0_i32_0, %c0_i32_1 : i32, i32, i32
  }
  func.func @transform_5(%arg0: i32) -> (i32, i32, i32) {
    %c0_i32 = arith.constant 0 : i32
    %c0_i32_0 = arith.constant 0 : i32
    %c0_i32_1 = arith.constant 0 : i32
    %c0_i32_2 = arith.constant 0 : i32
    return %c0_i32, %c0_i32_0, %c0_i32_1 : i32, i32, i32
  }
  func.func @transform_6(%arg0: i32) -> (i32, i32, i32) {
    %c0_i32 = arith.constant 0 : i32
    %c0_i32_0 = arith.constant 0 : i32
    %c0_i32_1 = arith.constant 0 : i32
    %c0_i32_2 = arith.constant 0 : i32
    return %c0_i32, %c0_i32_0, %c0_i32_1 : i32, i32, i32
  }
  func.func @transform_7(%arg0: i32) -> (i32, i32, i32) {
    %c0_i32 = arith.constant 0 : i32
    %c0_i32_0 = arith.constant 0 : i32
    %c0_i32_1 = arith.constant 0 : i32
    return %arg0, %c0_i32, %c0_i32_0 : i32, i32, i32
  }
}

</mosaic_0001>

<llo_original>
// kernel: tpu_custom_call.1
$region0: #{tpu_custom_call.1}
  #allocation0 [shape = 'u32[]', space=smem, size = 0x4, offset = 0x4, fixed_abs, tag = 'smem constant byte address 0x4 - core index']
  #allocation1 [shape = 'u32[144,128]{1,0:T(1,128)}', space=vmem, size = 0x12000, scoped, tag = 'internal scratch']
  #allocation2 [shape = 'f32[8,4,18]{2,1,0:T(4,128)}', space=vmem, size = 0x4000, scoped, tag = 'scratch operand']
  #allocation3 [shape = 'f32[8,8,18]{2,1,0:T(8,128)}', space=vmem, size = 0x8000, scoped, tag = 'scratch operand']
  %s0 = inlined_call_operand.vmem [shape: f32[16,4,16], index: 0, kind: input, shape index: {}]
  %s1 = inlined_call_operand.vmem [shape: f32[1,4,1], index: 1, kind: input, shape index: {}]
  %s2 = inlined_call_operand.vmem [shape: f32[1,4,1], index: 2, kind: input, shape index: {}]
  %s3 = inlined_call_operand.vmem [shape: f32[12,8,1], index: 3, kind: input, shape index: {}]
  %s4 = inlined_call_operand.vmem [shape: f32[1,8,1], index: 4, kind: input, shape index: {}]
  %s5 = inlined_call_operand.vmem [shape: f32[24,8,1], index: 5, kind: input, shape index: {}]
  %s6 = inlined_call_operand.vmem [shape: f32[1,8,1], index: 6, kind: input, shape index: {}]
  %s7 = inlined_call_operand.hbm [shape: f32[16,8,16], index: 7, kind: output, shape index: {}]
  %s8 = sld [smem:[#allocation0]]
  $region61: #{tpu_custom_call.1} parent=0
    _
  %s10 = ssub.s32 1, %s8
  %s11 = scalar_select 0, %s10, %s8
  $region1: #{tpu_custom_call.1} parent=0
    #allocation4 [shape = 'u8[65536]{0}', space=vmem, size = 0x10000, scoped, tag = 'output window, operand 0']
    #allocation5 [shape = 's32[2]{0}', space=sflag, size = 0x8, scoped, tag = 'scoped memory for tpu_custom_call.1']
    %12 = vsyncpa [#allocation5], 0
    %s13 = scalar_lea.sflag [#allocation5], 1
    %14 = vsyncpa %s13, 0
    loop: start=0, step=1, limit=4
    $region2: #{tpu_custom_call.1} parent=1 // loop_pre_header
      _
    $region3: #{tpu_custom_call.1} parent=1 // loop_header
      %s16 = sphi 0, %s20
      %p17 = scmp.ge.s32.totalorder %s16, 4
      %s26 = sphi 0, %s28
      %s29 = sphi 0, %s26
      %s30 = sphi 0, %s29
      %s46 = sphi 0, %s30
      %s50 = sphi 0, %s50
      %s52 = sphi 0, %s50
      %s53 = sphi 0, %s52
      %s67 = sphi 0, %s53
      %s71 = sphi 0, %s71
      %s73 = sphi 0, %s71
      %s74 = sphi 0, %s73
      %s88 = sphi 0, %s74
      %s92 = sphi 0, %s92
      %s94 = sphi 0, %s92
      %s95 = sphi 0, %s94
      %s109 = sphi 0, %s95
      %s113 = sphi 0, %s113
      %s115 = sphi 0, %s113
      %s116 = sphi 0, %s115
      %s130 = sphi 0, %s116
      %s134 = sphi 0, %s134
      %s136 = sphi 0, %s134
      %s137 = sphi 0, %s136
      %s151 = sphi 0, %s137
      %s155 = sphi 0, %s155
      %s157 = sphi 0, %s155
      %s158 = sphi 0, %s157
      %s172 = sphi 0, %s158
      %s178 = sphi 0, %s180
      %s181 = sphi 0, %s178
      %s182 = sphi 0, %s181
      %s198 = sphi 0, %s182
    $region4: #{tpu_custom_call.1} parent=1 // loop_header_branch
      %19 = sbr.rel (%p17) target = $region8
    $region5: #{tpu_custom_call.1} parent=1 // loop_body
      %s21 = ssub.s32 %s16, 1
      %s22 = ssub.s32 %s16, 2
      %s23 = sadd.s32 %s16, 1
      %s24 = ssub.s32 %s16, %s23
      %p25 = scmp.eq.s32.totalorder %s24, 0
      %s27 = sadd.s32 %s26, 1
      %s28 = scalar_select %p25, %s26, %s27
      %p31 = pneg %p25
      %p32 = scmp.eq.s32.totalorder %s16, 1
      %p33 = por %p31, %p32
      %p34 = scmp.ne.s32.totalorder %s26, %s29
      %p35 = scmp.eq.s32.totalorder %s16, 0
      %p36 = por %p34, %p35
      %p37 = scmp.ne.s32.totalorder %s26, %s29
      %p38 = scmp.eq.s32.totalorder %s21, 1
      %p39 = por %p37, %p38
      %p40 = scmp.ne.s32.totalorder %s29, %s30
      %p41 = scmp.eq.s32.totalorder %s21, 0
      %p42 = por %p40, %p41
      %p43 = scmp.ne.s32.totalorder %s29, %s30
      %p44 = scmp.eq.s32.totalorder %s22, 1
      %p45 = por %p43, %p44
      %p47 = scmp.ne.s32.totalorder %s30, %s46
      %p48 = scmp.eq.s32.totalorder %s22, 0
      %p49 = por %p47, %p48
      %s51 = sadd.s32 %s50, 1
      %p54 = scmp.eq.s32.totalorder %s16, 1
      %p55 = scmp.ne.s32.totalorder %s50, %s52
      %p56 = scmp.eq.s32.totalorder %s16, 0
      %p57 = por %p55, %p56
      %p58 = scmp.ne.s32.totalorder %s50, %s52
      %p59 = scmp.eq.s32.totalorder %s21, 1
      %p60 = por %p58, %p59
      %p61 = scmp.ne.s32.totalorder %s52, %s53
      %p62 = scmp.eq.s32.totalorder %s21, 0
      %p63 = por %p61, %p62
      %p64 = scmp.ne.s32.totalorder %s52, %s53
      %p65 = scmp.eq.s32.totalorder %s22, 1
      %p66 = por %p64, %p65
      %p68 = scmp.ne.s32.totalorder %s53, %s67
      %p69 = scmp.eq.s32.totalorder %s22, 0
      %p70 = por %p68, %p69
      %s72 = sadd.s32 %s71, 1
      %p75 = scmp.eq.s32.totalorder %s16, 1
      %p76 = scmp.ne.s32.totalorder %s71, %s73
      %p77 = scmp.eq.s32.totalorder %s16, 0
      %p78 = por %p76, %p77
      %p79 = scmp.ne.s32.totalorder %s71, %s73
      %p80 = scmp.eq.s32.totalorder %s21, 1
      %p81 = por %p79, %p80
      %p82 = scmp.ne.s32.totalorder %s73, %s74
      %p83 = scmp.eq.s32.totalorder %s21, 0
      %p84 = por %p82, %p83
      %p85 = scmp.ne.s32.totalorder %s73, %s74
      %p86 = scmp.eq.s32.totalorder %s22, 1
      %p87 = por %p85, %p86
      %p89 = scmp.ne.s32.totalorder %s74, %s88
      %p90 = scmp.eq.s32.totalorder %s22, 0
      %p91 = por %p89, %p90
      %s93 = sadd.s32 %s92, 1
      %p96 = scmp.eq.s32.totalorder %s16, 1
      %p97 = scmp.ne.s32.totalorder %s92, %s94
      %p98 = scmp.eq.s32.totalorder %s16, 0
      %p99 = por %p97, %p98
      %p100 = scmp.ne.s32.totalorder %s92, %s94
      %p101 = scmp.eq.s32.totalorder %s21, 1
      %p102 = por %p100, %p101
      %p103 = scmp.ne.s32.totalorder %s94, %s95
      %p104 = scmp.eq.s32.totalorder %s21, 0
      %p105 = por %p103, %p104
      %p106 = scmp.ne.s32.totalorder %s94, %s95
      %p107 = scmp.eq.s32.totalorder %s22, 1
      %p108 = por %p106, %p107
      %p110 = scmp.ne.s32.totalorder %s95, %s109
      %p111 = scmp.eq.s32.totalorder %s22, 0
      %p112 = por %p110, %p111
      %s114 = sadd.s32 %s113, 1
      %p117 = scmp.eq.s32.totalorder %s16, 1
      %p118 = scmp.ne.s32.totalorder %s113, %s115
      %p119 = scmp.eq.s32.totalorder %s16, 0
      %p120 = por %p118, %p119
      %p121 = scmp.ne.s32.totalorder %s113, %s115
      %p122 = scmp.eq.s32.totalorder %s21, 1
      %p123 = por %p121, %p122
      %p124 = scmp.ne.s32.totalorder %s115, %s116
      %p125 = scmp.eq.s32.totalorder %s21, 0
      %p126 = por %p124, %p125
      %p127 = scmp.ne.s32.totalorder %s115, %s116
      %p128 = scmp.eq.s32.totalorder %s22, 1
      %p129 = por %p127, %p128
      %p131 = scmp.ne.s32.totalorder %s116, %s130
      %p132 = scmp.eq.s32.totalorder %s22, 0
      %p133 = por %p131, %p132
      %s135 = sadd.s32 %s134, 1
      %p138 = scmp.eq.s32.totalorder %s16, 1
      %p139 = scmp.ne.s32.totalorder %s134, %s136
      %p140 = scmp.eq.s32.totalorder %s16, 0
      %p141 = por %p139, %p140
      %p142 = scmp.ne.s32.totalorder %s134, %s136
      %p143 = scmp.eq.s32.totalorder %s21, 1
      %p144 = por %p142, %p143
      %p145 = scmp.ne.s32.totalorder %s136, %s137
      %p146 = scmp.eq.s32.totalorder %s21, 0
      %p147 = por %p145, %p146
      %p148 = scmp.ne.s32.totalorder %s136, %s137
      %p149 = scmp.eq.s32.totalorder %s22, 1
      %p150 = por %p148, %p149
      %p152 = scmp.ne.s32.totalorder %s137, %s151
      %p153 = scmp.eq.s32.totalorder %s22, 0
      %p154 = por %p152, %p153
      %s156 = sadd.s32 %s155, 1
      %p159 = scmp.eq.s32.totalorder %s16, 1
      %p160 = scmp.ne.s32.totalorder %s155, %s157
      %p161 = scmp.eq.s32.totalorder %s16, 0
      %p162 = por %p160, %p161
      %p163 = scmp.ne.s32.totalorder %s155, %s157
      %p164 = scmp.eq.s32.totalorder %s21, 1
      %p165 = por %p163, %p164
      %p166 = scmp.ne.s32.totalorder %s157, %s158
      %p167 = scmp.eq.s32.totalorder %s21, 0
      %p168 = por %p166, %p167
      %p169 = scmp.ne.s32.totalorder %s157, %s158
      %p170 = scmp.eq.s32.totalorder %s22, 1
      %p171 = por %p169, %p170
      %p173 = scmp.ne.s32.totalorder %s158, %s172
      %p174 = scmp.eq.s32.totalorder %s22, 0
      %p175 = por %p173, %p174
      %s176 = ssub.s32 %s16, %s23
      %p177 = scmp.eq.s32.totalorder %s176, 0
      %s179 = sadd.s32 %s178, 1
      %s180 = scalar_select %p177, %s178, %s179
      %p183 = pneg %p177
      %p184 = scmp.eq.s32.totalorder %s16, 1
      %p185 = por %p183, %p184
      %p186 = scmp.ne.s32.totalorder %s178, %s181
      %p187 = scmp.eq.s32.totalorder %s16, 0
      %p188 = por %p186, %p187
      %p189 = scmp.ne.s32.totalorder %s178, %s181
      %p190 = scmp.eq.s32.totalorder %s21, 1
      %p191 = por %p189, %p190
      %p192 = scmp.ne.s32.totalorder %s181, %s182
      %p193 = scmp.eq.s32.totalorder %s21, 0
      %p194 = por %p192, %p193
      %p195 = scmp.ne.s32.totalorder %s181, %s182
      %p196 = scmp.eq.s32.totalorder %s22, 1
      %p197 = por %p195, %p196
      %p199 = scmp.ne.s32.totalorder %s182, %s198
      %p200 = scmp.eq.s32.totalorder %s22, 0
      %p201 = por %p199, %p200
      %p202 = scmp.le.s32.totalorder 1, %s16
      %p203 = scmp.lt.s32.totalorder %s16, 3
      %p204 = pnand %p202, %p203
      %p205 = pneg %p204
      // Predicated region
      $region9: #{tpu_custom_call.1} parent=5 // pred_check
        _
      $region10: #{tpu_custom_call.1} parent=5 // pred_check_branch
        %207 = sbr.rel (%p204) target = $region12
      $region11: #{tpu_custom_call.1} parent=5 // pred_region
        %s208 = ssub.s32 %s16, 1
        // Predicated region
        $region13: #{tpu_custom_call.1} parent=11 // pred_check
          %p209 = pneg %p63
        $region14: #{tpu_custom_call.1} parent=11 // pred_check_branch
          %211 = sbr.rel (%p209) target = $region16
        $region15: #{tpu_custom_call.1} parent=11 // pred_region
          _
        $region16: #{tpu_custom_call.1} parent=11 // pred_fallthru
          _
        // Predicated region
        $region17: #{tpu_custom_call.1} parent=11 // pred_check
          %p212 = pneg %p84
        $region18: #{tpu_custom_call.1} parent=11 // pred_check_branch
          %214 = sbr.rel (%p212) target = $region20
        $region19: #{tpu_custom_call.1} parent=11 // pred_region
          _
        $region20: #{tpu_custom_call.1} parent=11 // pred_fallthru
          _
        // Predicated region
        $region21: #{tpu_custom_call.1} parent=11 // pred_check
          %p215 = pneg %p105
        $region22: #{tpu_custom_call.1} parent=11 // pred_check_branch
          %217 = sbr.rel (%p215) target = $region24
        $region23: #{tpu_custom_call.1} parent=11 // pred_region
          _
        $region24: #{tpu_custom_call.1} parent=11 // pred_fallthru
          _
        // Predicated region
        $region25: #{tpu_custom_call.1} parent=11 // pred_check
          %p218 = pneg %p126
        $region26: #{tpu_custom_call.1} parent=11 // pred_check_branch
          %220 = sbr.rel (%p218) target = $region28
        $region27: #{tpu_custom_call.1} parent=11 // pred_region
          _
        $region28: #{tpu_custom_call.1} parent=11 // pred_fallthru
          _
        // Predicated region
        $region29: #{tpu_custom_call.1} parent=11 // pred_check
          %p221 = pneg %p147
        $region30: #{tpu_custom_call.1} parent=11 // pred_check_branch
          %223 = sbr.rel (%p221) target = $region32
        $region31: #{tpu_custom_call.1} parent=11 // pred_region
          _
        $region32: #{tpu_custom_call.1} parent=11 // pred_fallthru
          _
        // Predicated region
        $region33: #{tpu_custom_call.1} parent=11 // pred_check
          %p224 = pneg %p168
        $region34: #{tpu_custom_call.1} parent=11 // pred_check_branch
          %226 = sbr.rel (%p224) target = $region36
        $region35: #{tpu_custom_call.1} parent=11 // pred_region
          _
        $region36: #{tpu_custom_call.1} parent=11 // pred_fallthru
          _
      $region12: #{tpu_custom_call.1} parent=5 // pred_fallthru
        _
      %p227 = scmp.lt.s32.totalorder %s16, 2
      // Predicated region
      $region37: #{tpu_custom_call.1} parent=5 // pred_check
        %p228 = pneg %p227
      $region38: #{tpu_custom_call.1} parent=5 // pred_check_branch
        %230 = sbr.rel (%p228) target = $region40
      $region39: #{tpu_custom_call.1} parent=5 // pred_region
        // Predicated region
        $region41: #{tpu_custom_call.1} parent=39 // pred_check
          %p231 = pneg %p36
        $region42: #{tpu_custom_call.1} parent=39 // pred_check_branch
          %233 = sbr.rel (%p231) target = $region44
        $region43: #{tpu_custom_call.1} parent=39 // pred_region
          %s234 = smul.u32 8, %s16
          %p235 = scmp.lt.s32.totalorder %s234, 15
          %s236 = scalar_select %p235, %s234, 15
          %s237 = smul.addr %s236, 4
          %s238 = scalar_lea.vmem %s0, %s237
          %s239 = smul.u32 8, %s16
        $region44: #{tpu_custom_call.1} parent=39 // pred_fallthru
          _
      $region40: #{tpu_custom_call.1} parent=5 // pred_fallthru
        _
      %p240 = scmp.le.s32.totalorder 1, %s16
      %p241 = scmp.lt.s32.totalorder %s16, 3
      %p242 = pnand %p240, %p241
      %p243 = pneg %p242
      // Predicated region
      $region45: #{tpu_custom_call.1} parent=5 // pred_check
        _
      $region46: #{tpu_custom_call.1} parent=5 // pred_check_branch
        %245 = sbr.rel (%p242) target = $region48
      $region47: #{tpu_custom_call.1} parent=5 // pred_region
        %s246 = ssub.s32 %s16, 1
        %s247 = smul.u32 8, %s21
        %p248 = scmp.lt.s32.totalorder %s247, 15
        %s249 = scalar_select %p248, %s247, 15
        %s250 = smul.addr %s249, 4
        %s251 = scalar_lea.vmem %s0, %s250
        %p252 = pneg %p42
        %p253 = pneg %p39
        %p254 = pneg %p63
        %p255 = pneg %p60
        %p256 = pneg %p84
        %p257 = pneg %p81
        %p258 = pneg %p105
        %p259 = pneg %p102
        %p260 = pneg %p126
        %p261 = pneg %p123
        %p262 = pneg %p147
        %p263 = pneg %p144
        %p264 = pneg %p168
        %p265 = pneg %p165
        %p266 = pneg %p194
        %p267 = pneg %p191
        %s268 = sand.u32 %s181, 1
        %s269 = scalar_lea.sflag [#allocation5], %s268
        %s270 = sand.u32 %s181, 1
        %s271 = smul.addr %s270, 64
        %s272 = scalar_lea.vmem [#allocation4], %s271
        %s273 = smul.u32 8, %s21
        %p274 = scmp.lt.s32.totalorder %s273, 15
        %s275 = scalar_select %p274, %s273, 15
        %s276 = smul.addr %s275, 4
        %s277 = scalar_lea.vmem %s0, %s276
        %s278 = smul.u32 8, %s21
        %s279 = smul.u32 8, %s21
        %v280 = vld [vmem:[%s277] sm:$0xf]
        %v281 = vld [vmem:[%s277 + $0x4] sm:$0xf]
        %v282 = vld [vmem:[%s277 + $0x8] sm:$0xf]
        %v283 = vld [vmem:[%s277 + $0xc] sm:$0xf]
        %v284 = vld [vmem:[%s277 + $0x10] sm:$0xf]
        %v285 = vld [vmem:[%s277 + $0x14] sm:$0xf]
        %v286 = vld [vmem:[%s277 + $0x18] sm:$0xf]
        %v287 = vld [vmem:[%s277 + $0x1c] sm:$0xf]
        %v288 = vld [vmem:[%s1] sm:$0xf]
        %290 = vset.pattern.permute.xlu0 0
        %291 = vperm.xlu0 %290, %v288
        %v292 = vpop.permute.xlu0 %291
        %v294 = vmul.f32 %v280, %v292
        %v295 = vmul.f32 %v281, %v292
        %v296 = vmul.f32 %v282, %v292
        %v297 = vmul.f32 %v283, %v292
        %v298 = vmul.f32 %v284, %v292
        %v299 = vmul.f32 %v285, %v292
        %v300 = vmul.f32 %v286, %v292
        %v301 = vmul.f32 %v287, %v292
        %v302 = vld [vmem:[%s2] sm:$0xf]
        %304 = vset.pattern.permute.xlu0 0
        %305 = vperm.xlu0 %304, %v302
        %v306 = vpop.permute.xlu0 %305
        %v308 = vadd.f32 %v294, %v306
        %v309 = vadd.f32 %v295, %v306
        %v310 = vadd.f32 %v296, %v306
        %v311 = vadd.f32 %v297, %v306
        %v312 = vadd.f32 %v298, %v306
        %v313 = vadd.f32 %v299, %v306
        %v314 = vadd.f32 %v300, %v306
        %v315 = vadd.f32 %v301, %v306
        %v316 = vmax.f32 %v308, 0.0
        %v317 = vmax.f32 %v309, 0.0
        %v318 = vmax.f32 %v310, 0.0
        %v319 = vmax.f32 %v311, 0.0
        %v320 = vmax.f32 %v312, 0.0
        %v321 = vmax.f32 %v313, 0.0
        %v322 = vmax.f32 %v314, 0.0
        %v323 = vmax.f32 %v315, 0.0
        %vm324 = vcmask 3072
        %325 = vst.msk [vmem:[#allocation2] sm:$0xf] %vm324, 0.0
        %326 = vst.msk [vmem:[#allocation2 + $0x4] sm:$0xf] %vm324, 0.0
        %327 = vst.msk [vmem:[#allocation2 + $0x8] sm:$0xf] %vm324, 0.0
        %328 = vst.msk [vmem:[#allocation2 + $0xc] sm:$0xf] %vm324, 0.0
        %329 = vst.msk [vmem:[#allocation2 + $0x10] sm:$0xf] %vm324, 0.0
        %330 = vst.msk [vmem:[#allocation2 + $0x14] sm:$0xf] %vm324, 0.0
        %331 = vst.msk [vmem:[#allocation2 + $0x18] sm:$0xf] %vm324, 0.0
        %332 = vst.msk [vmem:[#allocation2 + $0x1c] sm:$0xf] %vm324, 0.0
        %vm333 = vcmask 142472
        %334 = vst.msk [vmem:[#allocation2] sm:$0xf] %vm333, 0.0
        %335 = vst.msk [vmem:[#allocation2 + $0x4] sm:$0xf] %vm333, 0.0
        %336 = vst.msk [vmem:[#allocation2 + $0x8] sm:$0xf] %vm333, 0.0
        %337 = vst.msk [vmem:[#allocation2 + $0xc] sm:$0xf] %vm333, 0.0
        %338 = vst.msk [vmem:[#allocation2 + $0x10] sm:$0xf] %vm333, 0.0
        %339 = vst.msk [vmem:[#allocation2 + $0x14] sm:$0xf] %vm333, 0.0
        %340 = vst.msk [vmem:[#allocation2 + $0x18] sm:$0xf] %vm333, 0.0
        %341 = vst.msk [vmem:[#allocation2 + $0x1c] sm:$0xf] %vm333, 0.0
        %350 = vrot.lane.b32.xlu0 %v316, 1
        %v351 = vpop.permute.xlu0 %350
        %352 = vrot.lane.b32.xlu0 %v317, 1
        %v353 = vpop.permute.xlu0 %352
        %354 = vrot.lane.b32.xlu0 %v318, 1
        %v355 = vpop.permute.xlu0 %354
        %356 = vrot.lane.b32.xlu0 %v319, 1
        %v357 = vpop.permute.xlu0 %356
        %358 = vrot.lane.b32.xlu0 %v320, 1
        %v359 = vpop.permute.xlu0 %358
        %360 = vrot.lane.b32.xlu0 %v321, 1
        %v361 = vpop.permute.xlu0 %360
        %362 = vrot.lane.b32.xlu0 %v322, 1
        %v363 = vpop.permute.xlu0 %362
        %364 = vrot.lane.b32.xlu0 %v323, 1
        %v365 = vpop.permute.xlu0 %364
        %vm374 = vcmask 134152
        %375 = vst.msk [vmem:[#allocation2] sm:$0xf] %vm374, %v351
        %376 = vst.msk [vmem:[#allocation2 + $0x4] sm:$0xf] %vm374, %v353
        %377 = vst.msk [vmem:[#allocation2 + $0x8] sm:$0xf] %vm374, %v355
        %378 = vst.msk [vmem:[#allocation2 + $0xc] sm:$0xf] %vm374, %v357
        %379 = vst.msk [vmem:[#allocation2 + $0x10] sm:$0xf] %vm374, %v359
        %380 = vst.msk [vmem:[#allocation2 + $0x14] sm:$0xf] %vm374, %v361
        %381 = vst.msk [vmem:[#allocation2 + $0x18] sm:$0xf] %vm374, %v363
        %382 = vst.msk [vmem:[#allocation2 + $0x1c] sm:$0xf] %vm374, %v365
        %v383 = vld [vmem:[#allocation2] sm:$0x1]
        %v384 = vld [vmem:[#allocation2 + $0x4] sm:$0x1]
        %v385 = vld [vmem:[#allocation2 + $0x8] sm:$0x1]
        %v386 = vld [vmem:[#allocation2 + $0xc] sm:$0x1]
        %v387 = vld [vmem:[#allocation2 + $0x10] sm:$0x1]
        %v388 = vld [vmem:[#allocation2 + $0x14] sm:$0x1]
        %v389 = vld [vmem:[#allocation2 + $0x18] sm:$0x1]
        %v390 = vld [vmem:[#allocation2 + $0x1c] sm:$0x1]
        %v391 = vld [vmem:[%s3] sm:$0xff]
        %393 = vset.pattern.permute.xlu0 0
        %394 = vperm.xlu0 %393, %v391
        %v395 = vpop.permute.xlu0 %394
        %v397 = vlaneseq
        %v398 = vshrl.u32 %v397, 7
        %v399 = vsub.s32 0, %v398
        %v400 = vrot.slane %v383, %v399
        %v401 = vlaneseq
        %v402 = vshrl.u32 %v401, 7
        %v403 = vsub.s32 0, %v402
        %v404 = vrot.slane %v384, %v403
        %v405 = vlaneseq
        %v406 = vshrl.u32 %v405, 7
        %v407 = vsub.s32 0, %v406
        %v408 = vrot.slane %v385, %v407
        %v409 = vlaneseq
        %v410 = vshrl.u32 %v409, 7
        %v411 = vsub.s32 0, %v410
        %v412 = vrot.slane %v386, %v411
        %v413 = vlaneseq
        %v414 = vshrl.u32 %v413, 7
        %v415 = vsub.s32 0, %v414
        %v416 = vrot.slane %v387, %v415
        %v417 = vlaneseq
        %v418 = vshrl.u32 %v417, 7
        %v419 = vsub.s32 0, %v418
        %v420 = vrot.slane %v388, %v419
        %v421 = vlaneseq
        %v422 = vshrl.u32 %v421, 7
        %v423 = vsub.s32 0, %v422
        %v424 = vrot.slane %v389, %v423
        %v425 = vlaneseq
        %v426 = vshrl.u32 %v425, 7
        %v427 = vsub.s32 0, %v426
        %v428 = vrot.slane %v390, %v427
        %v429 = vmul.f32 %v395, %v400
        %v430 = vmul.f32 %v395, %v404
        %v431 = vmul.f32 %v395, %v408
        %v432 = vmul.f32 %v395, %v412
        %v433 = vmul.f32 %v395, %v416
        %v434 = vmul.f32 %v395, %v420
        %v435 = vmul.f32 %v395, %v424
        %v436 = vmul.f32 %v395, %v428
        %v437 = vadd.f32 %v429, 0.0
        %v438 = vadd.f32 %v430, 0.0
        %v439 = vadd.f32 %v431, 0.0
        %v440 = vadd.f32 %v432, 0.0
        %v441 = vadd.f32 %v433, 0.0
        %v442 = vadd.f32 %v434, 0.0
        %v443 = vadd.f32 %v435, 0.0
        %v444 = vadd.f32 %v436, 0.0
        %v445 = vld [vmem:[#allocation2 + $0x1] sm:$0x1]
        %v446 = vld [vmem:[#allocation2 + $0x5] sm:$0x1]
        %v447 = vld [vmem:[#allocation2 + $0x9] sm:$0x1]
        %v448 = vld [vmem:[#allocation2 + $0xd] sm:$0x1]
        %v449 = vld [vmem:[#allocation2 + $0x11] sm:$0x1]
        %v450 = vld [vmem:[#allocation2 + $0x15] sm:$0x1]
        %v451 = vld [vmem:[#allocation2 + $0x19] sm:$0x1]
        %v452 = vld [vmem:[#allocation2 + $0x1d] sm:$0x1]
        %s453 = scalar_lea.vmem %s3, 8
        %v454 = vld [vmem:[%s453] sm:$0xff]
        %456 = vset.pattern.permute.xlu0 0
        %457 = vperm.xlu0 %456, %v454
        %v458 = vpop.permute.xlu0 %457
        %v460 = vlaneseq
        %v461 = vshrl.u32 %v460, 7
        %v462 = vsub.s32 0, %v461
        %v463 = vrot.slane %v445, %v462
        %v464 = vlaneseq
        %v465 = vshrl.u32 %v464, 7
        %v466 = vsub.s32 0, %v465
        %v467 = vrot.slane %v446, %v466
        %v468 = vlaneseq
        %v469 = vshrl.u32 %v468, 7
        %v470 = vsub.s32 0, %v469
        %v471 = vrot.slane %v447, %v470
        %v472 = vlaneseq
        %v473 = vshrl.u32 %v472, 7
        %v474 = vsub.s32 0, %v473
        %v475 = vrot.slane %v448, %v474
        %v476 = vlaneseq
        %v477 = vshrl.u32 %v476, 7
        %v478 = vsub.s32 0, %v477
        %v479 = vrot.slane %v449, %v478
        %v480 = vlaneseq
        %v481 = vshrl.u32 %v480, 7
        %v482 = vsub.s32 0, %v481
        %v483 = vrot.slane %v450, %v482
        %v484 = vlaneseq
        %v485 = vshrl.u32 %v484, 7
        %v486 = vsub.s32 0, %v485
        %v487 = vrot.slane %v451, %v486
        %v488 = vlaneseq
        %v489 = vshrl.u32 %v488, 7
        %v490 = vsub.s32 0, %v489
        %v491 = vrot.slane %v452, %v490
        %v492 = vmul.f32 %v458, %v463
        %v493 = vmul.f32 %v458, %v467
        %v494 = vmul.f32 %v458, %v471
        %v495 = vmul.f32 %v458, %v475
        %v496 = vmul.f32 %v458, %v479
        %v497 = vmul.f32 %v458, %v483
        %v498 = vmul.f32 %v458, %v487
        %v499 = vmul.f32 %v458, %v491
        %v500 = vadd.f32 %v437, %v492
        %v501 = vadd.f32 %v438, %v493
        %v502 = vadd.f32 %v439, %v494
        %v503 = vadd.f32 %v440, %v495
        %v504 = vadd.f32 %v441, %v496
        %v505 = vadd.f32 %v442, %v497
        %v506 = vadd.f32 %v443, %v498
        %v507 = vadd.f32 %v444, %v499
        %v508 = vld [vmem:[#allocation2 + $0x2] sm:$0x1]
        %v509 = vld [vmem:[#allocation2 + $0x6] sm:$0x1]
        %v510 = vld [vmem:[#allocation2 + $0xa] sm:$0x1]
        %v511 = vld [vmem:[#allocation2 + $0xe] sm:$0x1]
        %v512 = vld [vmem:[#allocation2 + $0x12] sm:$0x1]
        %v513 = vld [vmem:[#allocation2 + $0x16] sm:$0x1]
        %v514 = vld [vmem:[#allocation2 + $0x1a] sm:$0x1]
        %v515 = vld [vmem:[#allocation2 + $0x1e] sm:$0x1]
        %s516 = scalar_lea.vmem %s3, 16
        %v517 = vld [vmem:[%s516] sm:$0xff]
        %519 = vset.pattern.permute.xlu0 0
        %520 = vperm.xlu0 %519, %v517
        %v521 = vpop.permute.xlu0 %520
        %v523 = vlaneseq
        %v524 = vshrl.u32 %v523, 7
        %v525 = vsub.s32 0, %v524
        %v526 = vrot.slane %v508, %v525
        %v527 = vlaneseq
        %v528 = vshrl.u32 %v527, 7
        %v529 = vsub.s32 0, %v528
        %v530 = vrot.slane %v509, %v529
        %v531 = vlaneseq
        %v532 = vshrl.u32 %v531, 7
        %v533 = vsub.s32 0, %v532
        %v534 = vrot.slane %v510, %v533
        %v535 = vlaneseq
        %v536 = vshrl.u32 %v535, 7
        %v537 = vsub.s32 0, %v536
        %v538 = vrot.slane %v511, %v537
        %v539 = vlaneseq
        %v540 = vshrl.u32 %v539, 7
        %v541 = vsub.s32 0, %v540
        %v542 = vrot.slane %v512, %v541
        %v543 = vlaneseq
        %v544 = vshrl.u32 %v543, 7
        %v545 = vsub.s32 0, %v544
        %v546 = vrot.slane %v513, %v545
        %v547 = vlaneseq
        %v548 = vshrl.u32 %v547, 7
        %v549 = vsub.s32 0, %v548
        %v550 = vrot.slane %v514, %v549
        %v551 = vlaneseq
        %v552 = vshrl.u32 %v551, 7
        %v553 = vsub.s32 0, %v552
        %v554 = vrot.slane %v515, %v553
        %v555 = vmul.f32 %v521, %v526
        %v556 = vmul.f32 %v521, %v530
        %v557 = vmul.f32 %v521, %v534
        %v558 = vmul.f32 %v521, %v538
        %v559 = vmul.f32 %v521, %v542
        %v560 = vmul.f32 %v521, %v546
        %v561 = vmul.f32 %v521, %v550
        %v562 = vmul.f32 %v521, %v554
        %v563 = vadd.f32 %v500, %v555
        %v564 = vadd.f32 %v501, %v556
        %v565 = vadd.f32 %v502, %v557
        %v566 = vadd.f32 %v503, %v558
        %v567 = vadd.f32 %v504, %v559
        %v568 = vadd.f32 %v505, %v560
        %v569 = vadd.f32 %v506, %v561
        %v570 = vadd.f32 %v507, %v562
        %v571 = vld [vmem:[#allocation2 + $0x3] sm:$0x1]
        %v572 = vld [vmem:[#allocation2 + $0x7] sm:$0x1]
        %v573 = vld [vmem:[#allocation2 + $0xb] sm:$0x1]
        %v574 = vld [vmem:[#allocation2 + $0xf] sm:$0x1]
        %v575 = vld [vmem:[#allocation2 + $0x13] sm:$0x1]
        %v576 = vld [vmem:[#allocation2 + $0x17] sm:$0x1]
        %v577 = vld [vmem:[#allocation2 + $0x1b] sm:$0x1]
        %v578 = vld [vmem:[#allocation2 + $0x1f] sm:$0x1]
        %s579 = scalar_lea.vmem %s3, 24
        %v580 = vld [vmem:[%s579] sm:$0xff]
        %582 = vset.pattern.permute.xlu0 0
        %583 = vperm.xlu0 %582, %v580
        %v584 = vpop.permute.xlu0 %583
        %v586 = vlaneseq
        %v587 = vshrl.u32 %v586, 7
        %v588 = vsub.s32 0, %v587
        %v589 = vrot.slane %v571, %v588
        %v590 = vlaneseq
        %v591 = vshrl.u32 %v590, 7
        %v592 = vsub.s32 0, %v591
        %v593 = vrot.slane %v572, %v592
        %v594 = vlaneseq
        %v595 = vshrl.u32 %v594, 7
        %v596 = vsub.s32 0, %v595
        %v597 = vrot.slane %v573, %v596
        %v598 = vlaneseq
        %v599 = vshrl.u32 %v598, 7
        %v600 = vsub.s32 0, %v599
        %v601 = vrot.slane %v574, %v600
        %v602 = vlaneseq
        %v603 = vshrl.u32 %v602, 7
        %v604 = vsub.s32 0, %v603
        %v605 = vrot.slane %v575, %v604
        %v606 = vlaneseq
        %v607 = vshrl.u32 %v606, 7
        %v608 = vsub.s32 0, %v607
        %v609 = vrot.slane %v576, %v608
        %v610 = vlaneseq
        %v611 = vshrl.u32 %v610, 7
        %v612 = vsub.s32 0, %v611
        %v613 = vrot.slane %v577, %v612
        %v614 = vlaneseq
        %v615 = vshrl.u32 %v614, 7
        %v616 = vsub.s32 0, %v615
        %v617 = vrot.slane %v578, %v616
        %v618 = vmul.f32 %v584, %v589
        %v619 = vmul.f32 %v584, %v593
        %v620 = vmul.f32 %v584, %v597
        %v621 = vmul.f32 %v584, %v601
        %v622 = vmul.f32 %v584, %v605
        %v623 = vmul.f32 %v584, %v609
        %v624 = vmul.f32 %v584, %v613
        %v625 = vmul.f32 %v584, %v617
        %v626 = vadd.f32 %v563, %v618
        %v627 = vadd.f32 %v564, %v619
        %v628 = vadd.f32 %v565, %v620
        %v629 = vadd.f32 %v566, %v621
        %v630 = vadd.f32 %v567, %v622
        %v631 = vadd.f32 %v568, %v623
        %v632 = vadd.f32 %v569, %v624
        %v633 = vadd.f32 %v570, %v625
        %s634 = scalar_lea.vmem %s3, 32
        %v635 = vld [vmem:[%s634] sm:$0xff]
        %637 = vset.pattern.permute.xlu0 0
        %638 = vperm.xlu0 %637, %v635
        %v639 = vpop.permute.xlu0 %638
        %v641 = vmul.f32 %v639, %v400
        %v642 = vmul.f32 %v639, %v404
        %v643 = vmul.f32 %v639, %v408
        %v644 = vmul.f32 %v639, %v412
        %v645 = vmul.f32 %v639, %v416
        %v646 = vmul.f32 %v639, %v420
        %v647 = vmul.f32 %v639, %v424
        %v648 = vmul.f32 %v639, %v428
        %657 = vrot.lane.b32.xlu0 %v641, 127
        %v658 = vpop.permute.xlu0 %657
        %659 = vrot.lane.b32.xlu0 %v642, 127
        %v660 = vpop.permute.xlu0 %659
        %661 = vrot.lane.b32.xlu0 %v643, 127
        %v662 = vpop.permute.xlu0 %661
        %663 = vrot.lane.b32.xlu0 %v644, 127
        %v664 = vpop.permute.xlu0 %663
        %665 = vrot.lane.b32.xlu0 %v645, 127
        %v666 = vpop.permute.xlu0 %665
        %667 = vrot.lane.b32.xlu0 %v646, 127
        %v668 = vpop.permute.xlu0 %667
        %669 = vrot.lane.b32.xlu0 %v647, 127
        %v670 = vpop.permute.xlu0 %669
        %671 = vrot.lane.b32.xlu0 %v648, 127
        %v672 = vpop.permute.xlu0 %671
        %v681 = vadd.f32 %v626, %v658
        %v682 = vadd.f32 %v627, %v660
        %v683 = vadd.f32 %v628, %v662
        %v684 = vadd.f32 %v629, %v664
        %v685 = vadd.f32 %v630, %v666
        %v686 = vadd.f32 %v631, %v668
        %v687 = vadd.f32 %v632, %v670
        %v688 = vadd.f32 %v633, %v672
        %s689 = scalar_lea.vmem %s3, 40
        %v690 = vld [vmem:[%s689] sm:$0xff]
        %692 = vset.pattern.permute.xlu0 0
        %693 = vperm.xlu0 %692, %v690
        %v694 = vpop.permute.xlu0 %693
        %v696 = vmul.f32 %v694, %v463
        %v697 = vmul.f32 %v694, %v467
        %v698 = vmul.f32 %v694, %v471
        %v699 = vmul.f32 %v694, %v475
        %v700 = vmul.f32 %v694, %v479
        %v701 = vmul.f32 %v694, %v483
        %v702 = vmul.f32 %v694, %v487
        %v703 = vmul.f32 %v694, %v491
        %712 = vrot.lane.b32.xlu0 %v696, 127
        %v713 = vpop.permute.xlu0 %712
        %714 = vrot.lane.b32.xlu0 %v697, 127
        %v715 = vpop.permute.xlu0 %714
        %716 = vrot.lane.b32.xlu0 %v698, 127
        %v717 = vpop.permute.xlu0 %716
        %718 = vrot.lane.b32.xlu0 %v699, 127
        %v719 = vpop.permute.xlu0 %718
        %720 = vrot.lane.b32.xlu0 %v700, 127
        %v721 = vpop.permute.xlu0 %720
        %722 = vrot.lane.b32.xlu0 %v701, 127
        %v723 = vpop.permute.xlu0 %722
        %724 = vrot.lane.b32.xlu0 %v702, 127
        %v725 = vpop.permute.xlu0 %724
        %726 = vrot.lane.b32.xlu0 %v703, 127
        %v727 = vpop.permute.xlu0 %726
        %v736 = vadd.f32 %v681, %v713
        %v737 = vadd.f32 %v682, %v715
        %v738 = vadd.f32 %v683, %v717
        %v739 = vadd.f32 %v684, %v719
        %v740 = vadd.f32 %v685, %v721
        %v741 = vadd.f32 %v686, %v723
        %v742 = vadd.f32 %v687, %v725
        %v743 = vadd.f32 %v688, %v727
        %s744 = scalar_lea.vmem %s3, 48
        %v745 = vld [vmem:[%s744] sm:$0xff]
        %747 = vset.pattern.permute.xlu0 0
        %748 = vperm.xlu0 %747, %v745
        %v749 = vpop.permute.xlu0 %748
        %v751 = vmul.f32 %v749, %v526
        %v752 = vmul.f32 %v749, %v530
        %v753 = vmul.f32 %v749, %v534
        %v754 = vmul.f32 %v749, %v538
        %v755 = vmul.f32 %v749, %v542
        %v756 = vmul.f32 %v749, %v546
        %v757 = vmul.f32 %v749, %v550
        %v758 = vmul.f32 %v749, %v554
        %767 = vrot.lane.b32.xlu0 %v751, 127
        %v768 = vpop.permute.xlu0 %767
        %769 = vrot.lane.b32.xlu0 %v752, 127
        %v770 = vpop.permute.xlu0 %769
        %771 = vrot.lane.b32.xlu0 %v753, 127
        %v772 = vpop.permute.xlu0 %771
        %773 = vrot.lane.b32.xlu0 %v754, 127
        %v774 = vpop.permute.xlu0 %773
        %775 = vrot.lane.b32.xlu0 %v755, 127
        %v776 = vpop.permute.xlu0 %775
        %777 = vrot.lane.b32.xlu0 %v756, 127
        %v778 = vpop.permute.xlu0 %777
        %779 = vrot.lane.b32.xlu0 %v757, 127
        %v780 = vpop.permute.xlu0 %779
        %781 = vrot.lane.b32.xlu0 %v758, 127
        %v782 = vpop.permute.xlu0 %781
        %v791 = vadd.f32 %v736, %v768
        %v792 = vadd.f32 %v737, %v770
        %v793 = vadd.f32 %v738, %v772
        %v794 = vadd.f32 %v739, %v774
        %v795 = vadd.f32 %v740, %v776
        %v796 = vadd.f32 %v741, %v778
        %v797 = vadd.f32 %v742, %v780
        %v798 = vadd.f32 %v743, %v782
        %s799 = scalar_lea.vmem %s3, 56
        %v800 = vld [vmem:[%s799] sm:$0xff]
        %802 = vset.pattern.permute.xlu0 0
        %803 = vperm.xlu0 %802, %v800
        %v804 = vpop.permute.xlu0 %803
        %v806 = vmul.f32 %v804, %v589
        %v807 = vmul.f32 %v804, %v593
        %v808 = vmul.f32 %v804, %v597
        %v809 = vmul.f32 %v804, %v601
        %v810 = vmul.f32 %v804, %v605
        %v811 = vmul.f32 %v804, %v609
        %v812 = vmul.f32 %v804, %v613
        %v813 = vmul.f32 %v804, %v617
        %822 = vrot.lane.b32.xlu0 %v806, 127
        %v823 = vpop.permute.xlu0 %822
        %824 = vrot.lane.b32.xlu0 %v807, 127
        %v825 = vpop.permute.xlu0 %824
        %826 = vrot.lane.b32.xlu0 %v808, 127
        %v827 = vpop.permute.xlu0 %826
        %828 = vrot.lane.b32.xlu0 %v809, 127
        %v829 = vpop.permute.xlu0 %828
        %830 = vrot.lane.b32.xlu0 %v810, 127
        %v831 = vpop.permute.xlu0 %830
        %832 = vrot.lane.b32.xlu0 %v811, 127
        %v833 = vpop.permute.xlu0 %832
        %834 = vrot.lane.b32.xlu0 %v812, 127
        %v835 = vpop.permute.xlu0 %834
        %836 = vrot.lane.b32.xlu0 %v813, 127
        %v837 = vpop.permute.xlu0 %836
        %v846 = vadd.f32 %v791, %v823
        %v847 = vadd.f32 %v792, %v825
        %v848 = vadd.f32 %v793, %v827
        %v849 = vadd.f32 %v794, %v829
        %v850 = vadd.f32 %v795, %v831
        %v851 = vadd.f32 %v796, %v833
        %v852 = vadd.f32 %v797, %v835
        %v853 = vadd.f32 %v798, %v837
        %s854 = scalar_lea.vmem %s3, 64
        %v855 = vld [vmem:[%s854] sm:$0xff]
        %857 = vset.pattern.permute.xlu0 0
        %858 = vperm.xlu0 %857, %v855
        %v859 = vpop.permute.xlu0 %858
        %v861 = vmul.f32 %v859, %v400
        %v862 = vmul.f32 %v859, %v404
        %v863 = vmul.f32 %v859, %v408
        %v864 = vmul.f32 %v859, %v412
        %v865 = vmul.f32 %v859, %v416
        %v866 = vmul.f32 %v859, %v420
        %v867 = vmul.f32 %v859, %v424
        %v868 = vmul.f32 %v859, %v428
        %877 = vrot.lane.b32.xlu0 %v861, 126
        %v878 = vpop.permute.xlu0 %877
        %879 = vrot.lane.b32.xlu0 %v862, 126
        %v880 = vpop.permute.xlu0 %879
        %881 = vrot.lane.b32.xlu0 %v863, 126
        %v882 = vpop.permute.xlu0 %881
        %883 = vrot.lane.b32.xlu0 %v864, 126
        %v884 = vpop.permute.xlu0 %883
        %885 = vrot.lane.b32.xlu0 %v865, 126
        %v886 = vpop.permute.xlu0 %885
        %887 = vrot.lane.b32.xlu0 %v866, 126
        %v888 = vpop.permute.xlu0 %887
        %889 = vrot.lane.b32.xlu0 %v867, 126
        %v890 = vpop.permute.xlu0 %889
        %891 = vrot.lane.b32.xlu0 %v868, 126
        %v892 = vpop.permute.xlu0 %891
        %v901 = vadd.f32 %v846, %v878
        %v902 = vadd.f32 %v847, %v880
        %v903 = vadd.f32 %v848, %v882
        %v904 = vadd.f32 %v849, %v884
        %v905 = vadd.f32 %v850, %v886
        %v906 = vadd.f32 %v851, %v888
        %v907 = vadd.f32 %v852, %v890
        %v908 = vadd.f32 %v853, %v892
        %s909 = scalar_lea.vmem %s3, 72
        %v910 = vld [vmem:[%s909] sm:$0xff]
        %912 = vset.pattern.permute.xlu0 0
        %913 = vperm.xlu0 %912, %v910
        %v914 = vpop.permute.xlu0 %913
        %v916 = vmul.f32 %v914, %v463
        %v917 = vmul.f32 %v914, %v467
        %v918 = vmul.f32 %v914, %v471
        %v919 = vmul.f32 %v914, %v475
        %v920 = vmul.f32 %v914, %v479
        %v921 = vmul.f32 %v914, %v483
        %v922 = vmul.f32 %v914, %v487
        %v923 = vmul.f32 %v914, %v491
        %932 = vrot.lane.b32.xlu0 %v916, 126
        %v933 = vpop.permute.xlu0 %932
        %934 = vrot.lane.b32.xlu0 %v917, 126
        %v935 = vpop.permute.xlu0 %934
        %936 = vrot.lane.b32.xlu0 %v918, 126
        %v937 = vpop.permute.xlu0 %936
        %938 = vrot.lane.b32.xlu0 %v919, 126
        %v939 = vpop.permute.xlu0 %938
        %940 = vrot.lane.b32.xlu0 %v920, 126
        %v941 = vpop.permute.xlu0 %940
        %942 = vrot.lane.b32.xlu0 %v921, 126
        %v943 = vpop.permute.xlu0 %942
        %944 = vrot.lane.b32.xlu0 %v922, 126
        %v945 = vpop.permute.xlu0 %944
        %946 = vrot.lane.b32.xlu0 %v923, 126
        %v947 = vpop.permute.xlu0 %946
        %v956 = vadd.f32 %v901, %v933
        %v957 = vadd.f32 %v902, %v935
        %v958 = vadd.f32 %v903, %v937
        %v959 = vadd.f32 %v904, %v939
        %v960 = vadd.f32 %v905, %v941
        %v961 = vadd.f32 %v906, %v943
        %v962 = vadd.f32 %v907, %v945
        %v963 = vadd.f32 %v908, %v947
        %s964 = scalar_lea.vmem %s3, 80
        %v965 = vld [vmem:[%s964] sm:$0xff]
        %967 = vset.pattern.permute.xlu0 0
        %968 = vperm.xlu0 %967, %v965
        %v969 = vpop.permute.xlu0 %968
        %v971 = vmul.f32 %v969, %v526
        %v972 = vmul.f32 %v969, %v530
        %v973 = vmul.f32 %v969, %v534
        %v974 = vmul.f32 %v969, %v538
        %v975 = vmul.f32 %v969, %v542
        %v976 = vmul.f32 %v969, %v546
        %v977 = vmul.f32 %v969, %v550
        %v978 = vmul.f32 %v969, %v554
        %987 = vrot.lane.b32.xlu0 %v971, 126
        %v988 = vpop.permute.xlu0 %987
        %989 = vrot.lane.b32.xlu0 %v972, 126
        %v990 = vpop.permute.xlu0 %989
        %991 = vrot.lane.b32.xlu0 %v973, 126
        %v992 = vpop.permute.xlu0 %991
        %993 = vrot.lane.b32.xlu0 %v974, 126
        %v994 = vpop.permute.xlu0 %993
        %995 = vrot.lane.b32.xlu0 %v975, 126
        %v996 = vpop.permute.xlu0 %995
        %997 = vrot.lane.b32.xlu0 %v976, 126
        %v998 = vpop.permute.xlu0 %997
        %999 = vrot.lane.b32.xlu0 %v977, 126
        %v1000 = vpop.permute.xlu0 %999
        %1001 = vrot.lane.b32.xlu0 %v978, 126
        %v1002 = vpop.permute.xlu0 %1001
        %v1011 = vadd.f32 %v956, %v988
        %v1012 = vadd.f32 %v957, %v990
        %v1013 = vadd.f32 %v958, %v992
        %v1014 = vadd.f32 %v959, %v994
        %v1015 = vadd.f32 %v960, %v996
        %v1016 = vadd.f32 %v961, %v998
        %v1017 = vadd.f32 %v962, %v1000
        %v1018 = vadd.f32 %v963, %v1002
        %s1019 = scalar_lea.vmem %s3, 88
        %v1020 = vld [vmem:[%s1019] sm:$0xff]
        %1022 = vset.pattern.permute.xlu0 0
        %1023 = vperm.xlu0 %1022, %v1020
        %v1024 = vpop.permute.xlu0 %1023
        %v1026 = vmul.f32 %v1024, %v589
        %v1027 = vmul.f32 %v1024, %v593
        %v1028 = vmul.f32 %v1024, %v597
        %v1029 = vmul.f32 %v1024, %v601
        %v1030 = vmul.f32 %v1024, %v605
        %v1031 = vmul.f32 %v1024, %v609
        %v1032 = vmul.f32 %v1024, %v613
        %v1033 = vmul.f32 %v1024, %v617
        %1042 = vrot.lane.b32.xlu0 %v1026, 126
        %v1043 = vpop.permute.xlu0 %1042
        %1044 = vrot.lane.b32.xlu0 %v1027, 126
        %v1045 = vpop.permute.xlu0 %1044
        %1046 = vrot.lane.b32.xlu0 %v1028, 126
        %v1047 = vpop.permute.xlu0 %1046
        %1048 = vrot.lane.b32.xlu0 %v1029, 126
        %v1049 = vpop.permute.xlu0 %1048
        %1050 = vrot.lane.b32.xlu0 %v1030, 126
        %v1051 = vpop.permute.xlu0 %1050
        %1052 = vrot.lane.b32.xlu0 %v1031, 126
        %v1053 = vpop.permute.xlu0 %1052
        %1054 = vrot.lane.b32.xlu0 %v1032, 126
        %v1055 = vpop.permute.xlu0 %1054
        %1056 = vrot.lane.b32.xlu0 %v1033, 126
        %v1057 = vpop.permute.xlu0 %1056
        %v1066 = vadd.f32 %v1011, %v1043
        %v1067 = vadd.f32 %v1012, %v1045
        %v1068 = vadd.f32 %v1013, %v1047
        %v1069 = vadd.f32 %v1014, %v1049
        %v1070 = vadd.f32 %v1015, %v1051
        %v1071 = vadd.f32 %v1016, %v1053
        %v1072 = vadd.f32 %v1017, %v1055
        %v1073 = vadd.f32 %v1018, %v1057
        %v1074 = vld [vmem:[%s4] sm:$0xff]
        %1076 = vset.pattern.permute.xlu0 0
        %1077 = vperm.xlu0 %1076, %v1074
        %v1078 = vpop.permute.xlu0 %1077
        %v1080 = vadd.f32 %v1066, %v1078
        %v1081 = vadd.f32 %v1067, %v1078
        %v1082 = vadd.f32 %v1068, %v1078
        %v1083 = vadd.f32 %v1069, %v1078
        %v1084 = vadd.f32 %v1070, %v1078
        %v1085 = vadd.f32 %v1071, %v1078
        %v1086 = vadd.f32 %v1072, %v1078
        %v1087 = vadd.f32 %v1073, %v1078
        %v1088 = vmax.f32 %v1080, 0.0
        %v1089 = vmax.f32 %v1081, 0.0
        %v1090 = vmax.f32 %v1082, 0.0
        %v1091 = vmax.f32 %v1083, 0.0
        %v1092 = vmax.f32 %v1084, 0.0
        %v1093 = vmax.f32 %v1085, 0.0
        %v1094 = vmax.f32 %v1086, 0.0
        %v1095 = vmax.f32 %v1087, 0.0
        %vm1096 = vcmask 7168
        %1097 = vst.msk [vmem:[#allocation3] sm:$0xff] %vm1096, 0.0
        %1098 = vst.msk [vmem:[#allocation3 + $0x8] sm:$0xff] %vm1096, 0.0
        %1099 = vst.msk [vmem:[#allocation3 + $0x10] sm:$0xff] %vm1096, 0.0
        %1100 = vst.msk [vmem:[#allocation3 + $0x18] sm:$0xff] %vm1096, 0.0
        %1101 = vst.msk [vmem:[#allocation3 + $0x20] sm:$0xff] %vm1096, 0.0
        %1102 = vst.msk [vmem:[#allocation3 + $0x28] sm:$0xff] %vm1096, 0.0
        %1103 = vst.msk [vmem:[#allocation3 + $0x30] sm:$0xff] %vm1096, 0.0
        %1104 = vst.msk [vmem:[#allocation3 + $0x38] sm:$0xff] %vm1096, 0.0
        %vm1105 = vcmask 146568
        %1106 = vst.msk [vmem:[#allocation3] sm:$0xff] %vm1105, 0.0
        %1107 = vst.msk [vmem:[#allocation3 + $0x8] sm:$0xff] %vm1105, 0.0
        %1108 = vst.msk [vmem:[#allocation3 + $0x10] sm:$0xff] %vm1105, 0.0
        %1109 = vst.msk [vmem:[#allocation3 + $0x18] sm:$0xff] %vm1105, 0.0
        %1110 = vst.msk [vmem:[#allocation3 + $0x20] sm:$0xff] %vm1105, 0.0
        %1111 = vst.msk [vmem:[#allocation3 + $0x28] sm:$0xff] %vm1105, 0.0
        %1112 = vst.msk [vmem:[#allocation3 + $0x30] sm:$0xff] %vm1105, 0.0
        %1113 = vst.msk [vmem:[#allocation3 + $0x38] sm:$0xff] %vm1105, 0.0
        %1122 = vrot.lane.b32.xlu0 %v1088, 1
        %v1123 = vpop.permute.xlu0 %1122
        %1124 = vrot.lane.b32.xlu0 %v1089, 1
        %v1125 = vpop.permute.xlu0 %1124
        %1126 = vrot.lane.b32.xlu0 %v1090, 1
        %v1127 = vpop.permute.xlu0 %1126
        %1128 = vrot.lane.b32.xlu0 %v1091, 1
        %v1129 = vpop.permute.xlu0 %1128
        %1130 = vrot.lane.b32.xlu0 %v1092, 1
        %v1131 = vpop.permute.xlu0 %1130
        %1132 = vrot.lane.b32.xlu0 %v1093, 1
        %v1133 = vpop.permute.xlu0 %1132
        %1134 = vrot.lane.b32.xlu0 %v1094, 1
        %v1135 = vpop.permute.xlu0 %1134
        %1136 = vrot.lane.b32.xlu0 %v1095, 1
        %v1137 = vpop.permute.xlu0 %1136
        %vm1146 = vcmask 138248
        %1147 = vst.msk [vmem:[#allocation3] sm:$0xff] %vm1146, %v1123
        %1148 = vst.msk [vmem:[#allocation3 + $0x8] sm:$0xff] %vm1146, %v1125
        %1149 = vst.msk [vmem:[#allocation3 + $0x10] sm:$0xff] %vm1146, %v1127
        %1150 = vst.msk [vmem:[#allocation3 + $0x18] sm:$0xff] %vm1146, %v1129
        %1151 = vst.msk [vmem:[#allocation3 + $0x20] sm:$0xff] %vm1146, %v1131
        %1152 = vst.msk [vmem:[#allocation3 + $0x28] sm:$0xff] %vm1146, %v1133
        %1153 = vst.msk [vmem:[#allocation3 + $0x30] sm:$0xff] %vm1146, %v1135
        %1154 = vst.msk [vmem:[#allocation3 + $0x38] sm:$0xff] %vm1146, %v1137
        %v1155 = vld [vmem:[#allocation3] sm:$0x1]
        %v1156 = vld [vmem:[#allocation3 + $0x8] sm:$0x1]
        %v1157 = vld [vmem:[#allocation3 + $0x10] sm:$0x1]
        %v1158 = vld [vmem:[#allocation3 + $0x18] sm:$0x1]
        %v1159 = vld [vmem:[#allocation3 + $0x20] sm:$0x1]
        %v1160 = vld [vmem:[#allocation3 + $0x28] sm:$0x1]
        %v1161 = vld [vmem:[#allocation3 + $0x30] sm:$0x1]
        %v1162 = vld [vmem:[#allocation3 + $0x38] sm:$0x1]
        %v1163 = vld [vmem:[%s5] sm:$0xff]
        %1165 = vset.pattern.permute.xlu0 0
        %1166 = vperm.xlu0 %1165, %v1163
        %v1167 = vpop.permute.xlu0 %1166
        %v1169 = vlaneseq
        %v1170 = vshrl.u32 %v1169, 7
        %v1171 = vsub.s32 0, %v1170
        %v1172 = vrot.slane %v1155, %v1171
        %v1173 = vlaneseq
        %v1174 = vshrl.u32 %v1173, 7
        %v1175 = vsub.s32 0, %v1174
        %v1176 = vrot.slane %v1156, %v1175
        %v1177 = vlaneseq
        %v1178 = vshrl.u32 %v1177, 7
        %v1179 = vsub.s32 0, %v1178
        %v1180 = vrot.slane %v1157, %v1179
        %v1181 = vlaneseq
        %v1182 = vshrl.u32 %v1181, 7
        %v1183 = vsub.s32 0, %v1182
        %v1184 = vrot.slane %v1158, %v1183
        %v1185 = vlaneseq
        %v1186 = vshrl.u32 %v1185, 7
        %v1187 = vsub.s32 0, %v1186
        %v1188 = vrot.slane %v1159, %v1187
        %v1189 = vlaneseq
        %v1190 = vshrl.u32 %v1189, 7
        %v1191 = vsub.s32 0, %v1190
        %v1192 = vrot.slane %v1160, %v1191
        %v1193 = vlaneseq
        %v1194 = vshrl.u32 %v1193, 7
        %v1195 = vsub.s32 0, %v1194
        %v1196 = vrot.slane %v1161, %v1195
        %v1197 = vlaneseq
        %v1198 = vshrl.u32 %v1197, 7
        %v1199 = vsub.s32 0, %v1198
        %v1200 = vrot.slane %v1162, %v1199
        %v1201 = vmul.f32 %v1167, %v1172
        %v1202 = vmul.f32 %v1167, %v1176
        %v1203 = vmul.f32 %v1167, %v1180
        %v1204 = vmul.f32 %v1167, %v1184
        %v1205 = vmul.f32 %v1167, %v1188
        %v1206 = vmul.f32 %v1167, %v1192
        %v1207 = vmul.f32 %v1167, %v1196
        %v1208 = vmul.f32 %v1167, %v1200
        %v1209 = vadd.f32 %v1201, 0.0
        %v1210 = vadd.f32 %v1202, 0.0
        %v1211 = vadd.f32 %v1203, 0.0
        %v1212 = vadd.f32 %v1204, 0.0
        %v1213 = vadd.f32 %v1205, 0.0
        %v1214 = vadd.f32 %v1206, 0.0
        %v1215 = vadd.f32 %v1207, 0.0
        %v1216 = vadd.f32 %v1208, 0.0
        %v1217 = vld [vmem:[#allocation3 + $0x1] sm:$0x1]
        %v1218 = vld [vmem:[#allocation3 + $0x9] sm:$0x1]
        %v1219 = vld [vmem:[#allocation3 + $0x11] sm:$0x1]
        %v1220 = vld [vmem:[#allocation3 + $0x19] sm:$0x1]
        %v1221 = vld [vmem:[#allocation3 + $0x21] sm:$0x1]
        %v1222 = vld [vmem:[#allocation3 + $0x29] sm:$0x1]
        %v1223 = vld [vmem:[#allocation3 + $0x31] sm:$0x1]
        %v1224 = vld [vmem:[#allocation3 + $0x39] sm:$0x1]
        %s1225 = scalar_lea.vmem %s5, 8
        %v1226 = vld [vmem:[%s1225] sm:$0xff]
        %1228 = vset.pattern.permute.xlu0 0
        %1229 = vperm.xlu0 %1228, %v1226
        %v1230 = vpop.permute.xlu0 %1229
        %v1232 = vlaneseq
        %v1233 = vshrl.u32 %v1232, 7
        %v1234 = vsub.s32 0, %v1233
        %v1235 = vrot.slane %v1217, %v1234
        %v1236 = vlaneseq
        %v1237 = vshrl.u32 %v1236, 7
        %v1238 = vsub.s32 0, %v1237
        %v1239 = vrot.slane %v1218, %v1238
        %v1240 = vlaneseq
        %v1241 = vshrl.u32 %v1240, 7
        %v1242 = vsub.s32 0, %v1241
        %v1243 = vrot.slane %v1219, %v1242
        %v1244 = vlaneseq
        %v1245 = vshrl.u32 %v1244, 7
        %v1246 = vsub.s32 0, %v1245
        %v1247 = vrot.slane %v1220, %v1246
        %v1248 = vlaneseq
        %v1249 = vshrl.u32 %v1248, 7
        %v1250 = vsub.s32 0, %v1249
        %v1251 = vrot.slane %v1221, %v1250
        %v1252 = vlaneseq
        %v1253 = vshrl.u32 %v1252, 7
        %v1254 = vsub.s32 0, %v1253
        %v1255 = vrot.slane %v1222, %v1254
        %v1256 = vlaneseq
        %v1257 = vshrl.u32 %v1256, 7
        %v1258 = vsub.s32 0, %v1257
        %v1259 = vrot.slane %v1223, %v1258
        %v1260 = vlaneseq
        %v1261 = vshrl.u32 %v1260, 7
        %v1262 = vsub.s32 0, %v1261
        %v1263 = vrot.slane %v1224, %v1262
        %v1264 = vmul.f32 %v1230, %v1235
        %v1265 = vmul.f32 %v1230, %v1239
        %v1266 = vmul.f32 %v1230, %v1243
        %v1267 = vmul.f32 %v1230, %v1247
        %v1268 = vmul.f32 %v1230, %v1251
        %v1269 = vmul.f32 %v1230, %v1255
        %v1270 = vmul.f32 %v1230, %v1259
        %v1271 = vmul.f32 %v1230, %v1263
        %v1272 = vadd.f32 %v1209, %v1264
        %v1273 = vadd.f32 %v1210, %v1265
        %v1274 = vadd.f32 %v1211, %v1266
        %v1275 = vadd.f32 %v1212, %v1267
        %v1276 = vadd.f32 %v1213, %v1268
        %v1277 = vadd.f32 %v1214, %v1269
        %v1278 = vadd.f32 %v1215, %v1270
        %v1279 = vadd.f32 %v1216, %v1271
        %v1280 = vld [vmem:[#allocation3 + $0x2] sm:$0x1]
        %v1281 = vld [vmem:[#allocation3 + $0xa] sm:$0x1]
        %v1282 = vld [vmem:[#allocation3 + $0x12] sm:$0x1]
        %v1283 = vld [vmem:[#allocation3 + $0x1a] sm:$0x1]
        %v1284 = vld [vmem:[#allocation3 + $0x22] sm:$0x1]
        %v1285 = vld [vmem:[#allocation3 + $0x2a] sm:$0x1]
        %v1286 = vld [vmem:[#allocation3 + $0x32] sm:$0x1]
        %v1287 = vld [vmem:[#allocation3 + $0x3a] sm:$0x1]
        %s1288 = scalar_lea.vmem %s5, 16
        %v1289 = vld [vmem:[%s1288] sm:$0xff]
        %1291 = vset.pattern.permute.xlu0 0
        %1292 = vperm.xlu0 %1291, %v1289
        %v1293 = vpop.permute.xlu0 %1292
        %v1295 = vlaneseq
        %v1296 = vshrl.u32 %v1295, 7
        %v1297 = vsub.s32 0, %v1296
        %v1298 = vrot.slane %v1280, %v1297
        %v1299 = vlaneseq
        %v1300 = vshrl.u32 %v1299, 7
        %v1301 = vsub.s32 0, %v1300
        %v1302 = vrot.slane %v1281, %v1301
        %v1303 = vlaneseq
        %v1304 = vshrl.u32 %v1303, 7
        %v1305 = vsub.s32 0, %v1304
        %v1306 = vrot.slane %v1282, %v1305
        %v1307 = vlaneseq
        %v1308 = vshrl.u32 %v1307, 7
        %v1309 = vsub.s32 0, %v1308
        %v1310 = vrot.slane %v1283, %v1309
        %v1311 = vlaneseq
        %v1312 = vshrl.u32 %v1311, 7
        %v1313 = vsub.s32 0, %v1312
        %v1314 = vrot.slane %v1284, %v1313
        %v1315 = vlaneseq
        %v1316 = vshrl.u32 %v1315, 7
        %v1317 = vsub.s32 0, %v1316
        %v1318 = vrot.slane %v1285, %v1317
        %v1319 = vlaneseq
        %v1320 = vshrl.u32 %v1319, 7
        %v1321 = vsub.s32 0, %v1320
        %v1322 = vrot.slane %v1286, %v1321
        %v1323 = vlaneseq
        %v1324 = vshrl.u32 %v1323, 7
        %v1325 = vsub.s32 0, %v1324
        %v1326 = vrot.slane %v1287, %v1325
        %v1327 = vmul.f32 %v1293, %v1298
        %v1328 = vmul.f32 %v1293, %v1302
        %v1329 = vmul.f32 %v1293, %v1306
        %v1330 = vmul.f32 %v1293, %v1310
        %v1331 = vmul.f32 %v1293, %v1314
        %v1332 = vmul.f32 %v1293, %v1318
        %v1333 = vmul.f32 %v1293, %v1322
        %v1334 = vmul.f32 %v1293, %v1326
        %v1335 = vadd.f32 %v1272, %v1327
        %v1336 = vadd.f32 %v1273, %v1328
        %v1337 = vadd.f32 %v1274, %v1329
        %v1338 = vadd.f32 %v1275, %v1330
        %v1339 = vadd.f32 %v1276, %v1331
        %v1340 = vadd.f32 %v1277, %v1332
        %v1341 = vadd.f32 %v1278, %v1333
        %v1342 = vadd.f32 %v1279, %v1334
        %v1343 = vld [vmem:[#allocation3 + $0x3] sm:$0x1]
        %v1344 = vld [vmem:[#allocation3 + $0xb] sm:$0x1]
        %v1345 = vld [vmem:[#allocation3 + $0x13] sm:$0x1]
        %v1346 = vld [vmem:[#allocation3 + $0x1b] sm:$0x1]
        %v1347 = vld [vmem:[#allocation3 + $0x23] sm:$0x1]
        %v1348 = vld [vmem:[#allocation3 + $0x2b] sm:$0x1]
        %v1349 = vld [vmem:[#allocation3 + $0x33] sm:$0x1]
        %v1350 = vld [vmem:[#allocation3 + $0x3b] sm:$0x1]
        %s1351 = scalar_lea.vmem %s5, 24
        %v1352 = vld [vmem:[%s1351] sm:$0xff]
        %1354 = vset.pattern.permute.xlu0 0
        %1355 = vperm.xlu0 %1354, %v1352
        %v1356 = vpop.permute.xlu0 %1355
        %v1358 = vlaneseq
        %v1359 = vshrl.u32 %v1358, 7
        %v1360 = vsub.s32 0, %v1359
        %v1361 = vrot.slane %v1343, %v1360
        %v1362 = vlaneseq
        %v1363 = vshrl.u32 %v1362, 7
        %v1364 = vsub.s32 0, %v1363
        %v1365 = vrot.slane %v1344, %v1364
        %v1366 = vlaneseq
        %v1367 = vshrl.u32 %v1366, 7
        %v1368 = vsub.s32 0, %v1367
        %v1369 = vrot.slane %v1345, %v1368
        %v1370 = vlaneseq
        %v1371 = vshrl.u32 %v1370, 7
        %v1372 = vsub.s32 0, %v1371
        %v1373 = vrot.slane %v1346, %v1372
        %v1374 = vlaneseq
        %v1375 = vshrl.u32 %v1374, 7
        %v1376 = vsub.s32 0, %v1375
        %v1377 = vrot.slane %v1347, %v1376
        %v1378 = vlaneseq
        %v1379 = vshrl.u32 %v1378, 7
        %v1380 = vsub.s32 0, %v1379
        %v1381 = vrot.slane %v1348, %v1380
        %v1382 = vlaneseq
        %v1383 = vshrl.u32 %v1382, 7
        %v1384 = vsub.s32 0, %v1383
        %v1385 = vrot.slane %v1349, %v1384
        %v1386 = vlaneseq
        %v1387 = vshrl.u32 %v1386, 7
        %v1388 = vsub.s32 0, %v1387
        %v1389 = vrot.slane %v1350, %v1388
        %v1390 = vmul.f32 %v1356, %v1361
        %v1391 = vmul.f32 %v1356, %v1365
        %v1392 = vmul.f32 %v1356, %v1369
        %v1393 = vmul.f32 %v1356, %v1373
        %v1394 = vmul.f32 %v1356, %v1377
        %v1395 = vmul.f32 %v1356, %v1381
        %v1396 = vmul.f32 %v1356, %v1385
        %v1397 = vmul.f32 %v1356, %v1389
        %v1398 = vadd.f32 %v1335, %v1390
        %v1399 = vadd.f32 %v1336, %v1391
        %v1400 = vadd.f32 %v1337, %v1392
        %v1401 = vadd.f32 %v1338, %v1393
        %v1402 = vadd.f32 %v1339, %v1394
        %v1403 = vadd.f32 %v1340, %v1395
        %v1404 = vadd.f32 %v1341, %v1396
        %v1405 = vadd.f32 %v1342, %v1397
        %v1406 = vld [vmem:[#allocation3 + $0x4] sm:$0x1]
        %v1407 = vld [vmem:[#allocation3 + $0xc] sm:$0x1]
        %v1408 = vld [vmem:[#allocation3 + $0x14] sm:$0x1]
        %v1409 = vld [vmem:[#allocation3 + $0x1c] sm:$0x1]
        %v1410 = vld [vmem:[#allocation3 + $0x24] sm:$0x1]
        %v1411 = vld [vmem:[#allocation3 + $0x2c] sm:$0x1]
        %v1412 = vld [vmem:[#allocation3 + $0x34] sm:$0x1]
        %v1413 = vld [vmem:[#allocation3 + $0x3c] sm:$0x1]
        %s1414 = scalar_lea.vmem %s5, 32
        %v1415 = vld [vmem:[%s1414] sm:$0xff]
        %1417 = vset.pattern.permute.xlu0 0
        %1418 = vperm.xlu0 %1417, %v1415
        %v1419 = vpop.permute.xlu0 %1418
        %v1421 = vlaneseq
        %v1422 = vshrl.u32 %v1421, 7
        %v1423 = vsub.s32 0, %v1422
        %v1424 = vrot.slane %v1406, %v1423
        %v1425 = vlaneseq
        %v1426 = vshrl.u32 %v1425, 7
        %v1427 = vsub.s32 0, %v1426
        %v1428 = vrot.slane %v1407, %v1427
        %v1429 = vlaneseq
        %v1430 = vshrl.u32 %v1429, 7
        %v1431 = vsub.s32 0, %v1430
        %v1432 = vrot.slane %v1408, %v1431
        %v1433 = vlaneseq
        %v1434 = vshrl.u32 %v1433, 7
        %v1435 = vsub.s32 0, %v1434
        %v1436 = vrot.slane %v1409, %v1435
        %v1437 = vlaneseq
        %v1438 = vshrl.u32 %v1437, 7
        %v1439 = vsub.s32 0, %v1438
        %v1440 = vrot.slane %v1410, %v1439
        %v1441 = vlaneseq
        %v1442 = vshrl.u32 %v1441, 7
        %v1443 = vsub.s32 0, %v1442
        %v1444 = vrot.slane %v1411, %v1443
        %v1445 = vlaneseq
        %v1446 = vshrl.u32 %v1445, 7
        %v1447 = vsub.s32 0, %v1446
        %v1448 = vrot.slane %v1412, %v1447
        %v1449 = vlaneseq
        %v1450 = vshrl.u32 %v1449, 7
        %v1451 = vsub.s32 0, %v1450
        %v1452 = vrot.slane %v1413, %v1451
        %v1453 = vmul.f32 %v1419, %v1424
        %v1454 = vmul.f32 %v1419, %v1428
        %v1455 = vmul.f32 %v1419, %v1432
        %v1456 = vmul.f32 %v1419, %v1436
        %v1457 = vmul.f32 %v1419, %v1440
        %v1458 = vmul.f32 %v1419, %v1444
        %v1459 = vmul.f32 %v1419, %v1448
        %v1460 = vmul.f32 %v1419, %v1452
        %v1461 = vadd.f32 %v1398, %v1453
        %v1462 = vadd.f32 %v1399, %v1454
        %v1463 = vadd.f32 %v1400, %v1455
        %v1464 = vadd.f32 %v1401, %v1456
        %v1465 = vadd.f32 %v1402, %v1457
        %v1466 = vadd.f32 %v1403, %v1458
        %v1467 = vadd.f32 %v1404, %v1459
        %v1468 = vadd.f32 %v1405, %v1460
        %v1469 = vld [vmem:[#allocation3 + $0x5] sm:$0x1]
        %v1470 = vld [vmem:[#allocation3 + $0xd] sm:$0x1]
        %v1471 = vld [vmem:[#allocation3 + $0x15] sm:$0x1]
        %v1472 = vld [vmem:[#allocation3 + $0x1d] sm:$0x1]
        %v1473 = vld [vmem:[#allocation3 + $0x25] sm:$0x1]
        %v1474 = vld [vmem:[#allocation3 + $0x2d] sm:$0x1]
        %v1475 = vld [vmem:[#allocation3 + $0x35] sm:$0x1]
        %v1476 = vld [vmem:[#allocation3 + $0x3d] sm:$0x1]
        %s1477 = scalar_lea.vmem %s5, 40
        %v1478 = vld [vmem:[%s1477] sm:$0xff]
        %1480 = vset.pattern.permute.xlu0 0
        %1481 = vperm.xlu0 %1480, %v1478
        %v1482 = vpop.permute.xlu0 %1481
        %v1484 = vlaneseq
        %v1485 = vshrl.u32 %v1484, 7
        %v1486 = vsub.s32 0, %v1485
        %v1487 = vrot.slane %v1469, %v1486
        %v1488 = vlaneseq
        %v1489 = vshrl.u32 %v1488, 7
        %v1490 = vsub.s32 0, %v1489
        %v1491 = vrot.slane %v1470, %v1490
        %v1492 = vlaneseq
        %v1493 = vshrl.u32 %v1492, 7
        %v1494 = vsub.s32 0, %v1493
        %v1495 = vrot.slane %v1471, %v1494
        %v1496 = vlaneseq
        %v1497 = vshrl.u32 %v1496, 7
        %v1498 = vsub.s32 0, %v1497
        %v1499 = vrot.slane %v1472, %v1498
        %v1500 = vlaneseq
        %v1501 = vshrl.u32 %v1500, 7
        %v1502 = vsub.s32 0, %v1501
        %v1503 = vrot.slane %v1473, %v1502
        %v1504 = vlaneseq
        %v1505 = vshrl.u32 %v1504, 7
        %v1506 = vsub.s32 0, %v1505
        %v1507 = vrot.slane %v1474, %v1506
        %v1508 = vlaneseq
        %v1509 = vshrl.u32 %v1508, 7
        %v1510 = vsub.s32 0, %v1509
        %v1511 = vrot.slane %v1475, %v1510
        %v1512 = vlaneseq
        %v1513 = vshrl.u32 %v1512, 7
        %v1514 = vsub.s32 0, %v1513
        %v1515 = vrot.slane %v1476, %v1514
        %v1516 = vmul.f32 %v1482, %v1487
        %v1517 = vmul.f32 %v1482, %v1491
        %v1518 = vmul.f32 %v1482, %v1495
        %v1519 = vmul.f32 %v1482, %v1499
        %v1520 = vmul.f32 %v1482, %v1503
        %v1521 = vmul.f32 %v1482, %v1507
        %v1522 = vmul.f32 %v1482, %v1511
        %v1523 = vmul.f32 %v1482, %v1515
        %v1524 = vadd.f32 %v1461, %v1516
        %v1525 = vadd.f32 %v1462, %v1517
        %v1526 = vadd.f32 %v1463, %v1518
        %v1527 = vadd.f32 %v1464, %v1519
        %v1528 = vadd.f32 %v1465, %v1520
        %v1529 = vadd.f32 %v1466, %v1521
        %v1530 = vadd.f32 %v1467, %v1522
        %v1531 = vadd.f32 %v1468, %v1523
        %v1532 = vld [vmem:[#allocation3 + $0x6] sm:$0x1]
        %v1533 = vld [vmem:[#allocation3 + $0xe] sm:$0x1]
        %v1534 = vld [vmem:[#allocation3 + $0x16] sm:$0x1]
        %v1535 = vld [vmem:[#allocation3 + $0x1e] sm:$0x1]
        %v1536 = vld [vmem:[#allocation3 + $0x26] sm:$0x1]
        %v1537 = vld [vmem:[#allocation3 + $0x2e] sm:$0x1]
        %v1538 = vld [vmem:[#allocation3 + $0x36] sm:$0x1]
        %v1539 = vld [vmem:[#allocation3 + $0x3e] sm:$0x1]
        %s1540 = scalar_lea.vmem %s5, 48
        %v1541 = vld [vmem:[%s1540] sm:$0xff]
        %1543 = vset.pattern.permute.xlu0 0
        %1544 = vperm.xlu0 %1543, %v1541
        %v1545 = vpop.permute.xlu0 %1544
        %v1547 = vlaneseq
        %v1548 = vshrl.u32 %v1547, 7
        %v1549 = vsub.s32 0, %v1548
        %v1550 = vrot.slane %v1532, %v1549
        %v1551 = vlaneseq
        %v1552 = vshrl.u32 %v1551, 7
        %v1553 = vsub.s32 0, %v1552
        %v1554 = vrot.slane %v1533, %v1553
        %v1555 = vlaneseq
        %v1556 = vshrl.u32 %v1555, 7
        %v1557 = vsub.s32 0, %v1556
        %v1558 = vrot.slane %v1534, %v1557
        %v1559 = vlaneseq
        %v1560 = vshrl.u32 %v1559, 7
        %v1561 = vsub.s32 0, %v1560
        %v1562 = vrot.slane %v1535, %v1561
        %v1563 = vlaneseq
        %v1564 = vshrl.u32 %v1563, 7
        %v1565 = vsub.s32 0, %v1564
        %v1566 = vrot.slane %v1536, %v1565
        %v1567 = vlaneseq
        %v1568 = vshrl.u32 %v1567, 7
        %v1569 = vsub.s32 0, %v1568
        %v1570 = vrot.slane %v1537, %v1569
        %v1571 = vlaneseq
        %v1572 = vshrl.u32 %v1571, 7
        %v1573 = vsub.s32 0, %v1572
        %v1574 = vrot.slane %v1538, %v1573
        %v1575 = vlaneseq
        %v1576 = vshrl.u32 %v1575, 7
        %v1577 = vsub.s32 0, %v1576
        %v1578 = vrot.slane %v1539, %v1577
        %v1579 = vmul.f32 %v1545, %v1550
        %v1580 = vmul.f32 %v1545, %v1554
        %v1581 = vmul.f32 %v1545, %v1558
        %v1582 = vmul.f32 %v1545, %v1562
        %v1583 = vmul.f32 %v1545, %v1566
        %v1584 = vmul.f32 %v1545, %v1570
        %v1585 = vmul.f32 %v1545, %v1574
        %v1586 = vmul.f32 %v1545, %v1578
        %v1587 = vadd.f32 %v1524, %v1579
        %v1588 = vadd.f32 %v1525, %v1580
        %v1589 = vadd.f32 %v1526, %v1581
        %v1590 = vadd.f32 %v1527, %v1582
        %v1591 = vadd.f32 %v1528, %v1583
        %v1592 = vadd.f32 %v1529, %v1584
        %v1593 = vadd.f32 %v1530, %v1585
        %v1594 = vadd.f32 %v1531, %v1586
        %v1595 = vld [vmem:[#allocation3 + $0x7] sm:$0x1]
        %v1596 = vld [vmem:[#allocation3 + $0xf] sm:$0x1]
        %v1597 = vld [vmem:[#allocation3 + $0x17] sm:$0x1]
        %v1598 = vld [vmem:[#allocation3 + $0x1f] sm:$0x1]
        %v1599 = vld [vmem:[#allocation3 + $0x27] sm:$0x1]
        %v1600 = vld [vmem:[#allocation3 + $0x2f] sm:$0x1]
        %v1601 = vld [vmem:[#allocation3 + $0x37] sm:$0x1]
        %v1602 = vld [vmem:[#allocation3 + $0x3f] sm:$0x1]
        %s1603 = scalar_lea.vmem %s5, 56
        %v1604 = vld [vmem:[%s1603] sm:$0xff]
        %1606 = vset.pattern.permute.xlu0 0
        %1607 = vperm.xlu0 %1606, %v1604
        %v1608 = vpop.permute.xlu0 %1607
        %v1610 = vlaneseq
        %v1611 = vshrl.u32 %v1610, 7
        %v1612 = vsub.s32 0, %v1611
        %v1613 = vrot.slane %v1595, %v1612
        %v1614 = vlaneseq
        %v1615 = vshrl.u32 %v1614, 7
        %v1616 = vsub.s32 0, %v1615
        %v1617 = vrot.slane %v1596, %v1616
        %v1618 = vlaneseq
        %v1619 = vshrl.u32 %v1618, 7
        %v1620 = vsub.s32 0, %v1619
        %v1621 = vrot.slane %v1597, %v1620
        %v1622 = vlaneseq
        %v1623 = vshrl.u32 %v1622, 7
        %v1624 = vsub.s32 0, %v1623
        %v1625 = vrot.slane %v1598, %v1624
        %v1626 = vlaneseq
        %v1627 = vshrl.u32 %v1626, 7
        %v1628 = vsub.s32 0, %v1627
        %v1629 = vrot.slane %v1599, %v1628
        %v1630 = vlaneseq
        %v1631 = vshrl.u32 %v1630, 7
        %v1632 = vsub.s32 0, %v1631
        %v1633 = vrot.slane %v1600, %v1632
        %v1634 = vlaneseq
        %v1635 = vshrl.u32 %v1634, 7
        %v1636 = vsub.s32 0, %v1635
        %v1637 = vrot.slane %v1601, %v1636
        %v1638 = vlaneseq
        %v1639 = vshrl.u32 %v1638, 7
        %v1640 = vsub.s32 0, %v1639
        %v1641 = vrot.slane %v1602, %v1640
        %v1642 = vmul.f32 %v1608, %v1613
        %v1643 = vmul.f32 %v1608, %v1617
        %v1644 = vmul.f32 %v1608, %v1621
        %v1645 = vmul.f32 %v1608, %v1625
        %v1646 = vmul.f32 %v1608, %v1629
        %v1647 = vmul.f32 %v1608, %v1633
        %v1648 = vmul.f32 %v1608, %v1637
        %v1649 = vmul.f32 %v1608, %v1641
        %v1650 = vadd.f32 %v1587, %v1642
        %v1651 = vadd.f32 %v1588, %v1643
        %v1652 = vadd.f32 %v1589, %v1644
        %v1653 = vadd.f32 %v1590, %v1645
        %v1654 = vadd.f32 %v1591, %v1646
        %v1655 = vadd.f32 %v1592, %v1647
        %v1656 = vadd.f32 %v1593, %v1648
        %v1657 = vadd.f32 %v1594, %v1649
        %s1658 = scalar_lea.vmem %s5, 64
        %v1659 = vld [vmem:[%s1658] sm:$0xff]
        %1661 = vset.pattern.permute.xlu0 0
        %1662 = vperm.xlu0 %1661, %v1659
        %v1663 = vpop.permute.xlu0 %1662
        %v1665 = vmul.f32 %v1663, %v1172
        %v1666 = vmul.f32 %v1663, %v1176
        %v1667 = vmul.f32 %v1663, %v1180
        %v1668 = vmul.f32 %v1663, %v1184
        %v1669 = vmul.f32 %v1663, %v1188
        %v1670 = vmul.f32 %v1663, %v1192
        %v1671 = vmul.f32 %v1663, %v1196
        %v1672 = vmul.f32 %v1663, %v1200
        %1681 = vrot.lane.b32.xlu0 %v1665, 127
        %v1682 = vpop.permute.xlu0 %1681
        %1683 = vrot.lane.b32.xlu0 %v1666, 127
        %v1684 = vpop.permute.xlu0 %1683
        %1685 = vrot.lane.b32.xlu0 %v1667, 127
        %v1686 = vpop.permute.xlu0 %1685
        %1687 = vrot.lane.b32.xlu0 %v1668, 127
        %v1688 = vpop.permute.xlu0 %1687
        %1689 = vrot.lane.b32.xlu0 %v1669, 127
        %v1690 = vpop.permute.xlu0 %1689
        %1691 = vrot.lane.b32.xlu0 %v1670, 127
        %v1692 = vpop.permute.xlu0 %1691
        %1693 = vrot.lane.b32.xlu0 %v1671, 127
        %v1694 = vpop.permute.xlu0 %1693
        %1695 = vrot.lane.b32.xlu0 %v1672, 127
        %v1696 = vpop.permute.xlu0 %1695
        %v1705 = vadd.f32 %v1650, %v1682
        %v1706 = vadd.f32 %v1651, %v1684
        %v1707 = vadd.f32 %v1652, %v1686
        %v1708 = vadd.f32 %v1653, %v1688
        %v1709 = vadd.f32 %v1654, %v1690
        %v1710 = vadd.f32 %v1655, %v1692
        %v1711 = vadd.f32 %v1656, %v1694
        %v1712 = vadd.f32 %v1657, %v1696
        %s1713 = scalar_lea.vmem %s5, 72
        %v1714 = vld [vmem:[%s1713] sm:$0xff]
        %1716 = vset.pattern.permute.xlu0 0
        %1717 = vperm.xlu0 %1716, %v1714
        %v1718 = vpop.permute.xlu0 %1717
        %v1720 = vmul.f32 %v1718, %v1235
        %v1721 = vmul.f32 %v1718, %v1239
        %v1722 = vmul.f32 %v1718, %v1243
        %v1723 = vmul.f32 %v1718, %v1247
        %v1724 = vmul.f32 %v1718, %v1251
        %v1725 = vmul.f32 %v1718, %v1255
        %v1726 = vmul.f32 %v1718, %v1259
        %v1727 = vmul.f32 %v1718, %v1263
        %1736 = vrot.lane.b32.xlu0 %v1720, 127
        %v1737 = vpop.permute.xlu0 %1736
        %1738 = vrot.lane.b32.xlu0 %v1721, 127
        %v1739 = vpop.permute.xlu0 %1738
        %1740 = vrot.lane.b32.xlu0 %v1722, 127
        %v1741 = vpop.permute.xlu0 %1740
        %1742 = vrot.lane.b32.xlu0 %v1723, 127
        %v1743 = vpop.permute.xlu0 %1742
        %1744 = vrot.lane.b32.xlu0 %v1724, 127
        %v1745 = vpop.permute.xlu0 %1744
        %1746 = vrot.lane.b32.xlu0 %v1725, 127
        %v1747 = vpop.permute.xlu0 %1746
        %1748 = vrot.lane.b32.xlu0 %v1726, 127
        %v1749 = vpop.permute.xlu0 %1748
        %1750 = vrot.lane.b32.xlu0 %v1727, 127
        %v1751 = vpop.permute.xlu0 %1750
        %v1760 = vadd.f32 %v1705, %v1737
        %v1761 = vadd.f32 %v1706, %v1739
        %v1762 = vadd.f32 %v1707, %v1741
        %v1763 = vadd.f32 %v1708, %v1743
        %v1764 = vadd.f32 %v1709, %v1745
        %v1765 = vadd.f32 %v1710, %v1747
        %v1766 = vadd.f32 %v1711, %v1749
        %v1767 = vadd.f32 %v1712, %v1751
        %s1768 = scalar_lea.vmem %s5, 80
        %v1769 = vld [vmem:[%s1768] sm:$0xff]
        %1771 = vset.pattern.permute.xlu0 0
        %1772 = vperm.xlu0 %1771, %v1769
        %v1773 = vpop.permute.xlu0 %1772
        %v1775 = vmul.f32 %v1773, %v1298
        %v1776 = vmul.f32 %v1773, %v1302
        %v1777 = vmul.f32 %v1773, %v1306
        %v1778 = vmul.f32 %v1773, %v1310
        %v1779 = vmul.f32 %v1773, %v1314
        %v1780 = vmul.f32 %v1773, %v1318
        %v1781 = vmul.f32 %v1773, %v1322
        %v1782 = vmul.f32 %v1773, %v1326
        %1791 = vrot.lane.b32.xlu0 %v1775, 127
        %v1792 = vpop.permute.xlu0 %1791
        %1793 = vrot.lane.b32.xlu0 %v1776, 127
        %v1794 = vpop.permute.xlu0 %1793
        %1795 = vrot.lane.b32.xlu0 %v1777, 127
        %v1796 = vpop.permute.xlu0 %1795
        %1797 = vrot.lane.b32.xlu0 %v1778, 127
        %v1798 = vpop.permute.xlu0 %1797
        %1799 = vrot.lane.b32.xlu0 %v1779, 127
        %v1800 = vpop.permute.xlu0 %1799
        %1801 = vrot.lane.b32.xlu0 %v1780, 127
        %v1802 = vpop.permute.xlu0 %1801
        %1803 = vrot.lane.b32.xlu0 %v1781, 127
        %v1804 = vpop.permute.xlu0 %1803
        %1805 = vrot.lane.b32.xlu0 %v1782, 127
        %v1806 = vpop.permute.xlu0 %1805
        %v1815 = vadd.f32 %v1760, %v1792
        %v1816 = vadd.f32 %v1761, %v1794
        %v1817 = vadd.f32 %v1762, %v1796
        %v1818 = vadd.f32 %v1763, %v1798
        %v1819 = vadd.f32 %v1764, %v1800
        %v1820 = vadd.f32 %v1765, %v1802
        %v1821 = vadd.f32 %v1766, %v1804
        %v1822 = vadd.f32 %v1767, %v1806
        %s1823 = scalar_lea.vmem %s5, 88
        %v1824 = vld [vmem:[%s1823] sm:$0xff]
        %1826 = vset.pattern.permute.xlu0 0
        %1827 = vperm.xlu0 %1826, %v1824
        %v1828 = vpop.permute.xlu0 %1827
        %v1830 = vmul.f32 %v1828, %v1361
        %v1831 = vmul.f32 %v1828, %v1365
        %v1832 = vmul.f32 %v1828, %v1369
        %v1833 = vmul.f32 %v1828, %v1373
        %v1834 = vmul.f32 %v1828, %v1377
        %v1835 = vmul.f32 %v1828, %v1381
        %v1836 = vmul.f32 %v1828, %v1385
        %v1837 = vmul.f32 %v1828, %v1389
        %1846 = vrot.lane.b32.xlu0 %v1830, 127
        %v1847 = vpop.permute.xlu0 %1846
        %1848 = vrot.lane.b32.xlu0 %v1831, 127
        %v1849 = vpop.permute.xlu0 %1848
        %1850 = vrot.lane.b32.xlu0 %v1832, 127
        %v1851 = vpop.permute.xlu0 %1850
        %1852 = vrot.lane.b32.xlu0 %v1833, 127
        %v1853 = vpop.permute.xlu0 %1852
        %1854 = vrot.lane.b32.xlu0 %v1834, 127
        %v1855 = vpop.permute.xlu0 %1854
        %1856 = vrot.lane.b32.xlu0 %v1835, 127
        %v1857 = vpop.permute.xlu0 %1856
        %1858 = vrot.lane.b32.xlu0 %v1836, 127
        %v1859 = vpop.permute.xlu0 %1858
        %1860 = vrot.lane.b32.xlu0 %v1837, 127
        %v1861 = vpop.permute.xlu0 %1860
        %v1870 = vadd.f32 %v1815, %v1847
        %v1871 = vadd.f32 %v1816, %v1849
        %v1872 = vadd.f32 %v1817, %v1851
        %v1873 = vadd.f32 %v1818, %v1853
        %v1874 = vadd.f32 %v1819, %v1855
        %v1875 = vadd.f32 %v1820, %v1857
        %v1876 = vadd.f32 %v1821, %v1859
        %v1877 = vadd.f32 %v1822, %v1861
        %s1878 = scalar_lea.vmem %s5, 96
        %v1879 = vld [vmem:[%s1878] sm:$0xff]
        %1881 = vset.pattern.permute.xlu0 0
        %1882 = vperm.xlu0 %1881, %v1879
        %v1883 = vpop.permute.xlu0 %1882
        %v1885 = vmul.f32 %v1883, %v1424
        %v1886 = vmul.f32 %v1883, %v1428
        %v1887 = vmul.f32 %v1883, %v1432
        %v1888 = vmul.f32 %v1883, %v1436
        %v1889 = vmul.f32 %v1883, %v1440
        %v1890 = vmul.f32 %v1883, %v1444
        %v1891 = vmul.f32 %v1883, %v1448
        %v1892 = vmul.f32 %v1883, %v1452
        %1901 = vrot.lane.b32.xlu0 %v1885, 127
        %v1902 = vpop.permute.xlu0 %1901
        %1903 = vrot.lane.b32.xlu0 %v1886, 127
        %v1904 = vpop.permute.xlu0 %1903
        %1905 = vrot.lane.b32.xlu0 %v1887, 127
        %v1906 = vpop.permute.xlu0 %1905
        %1907 = vrot.lane.b32.xlu0 %v1888, 127
        %v1908 = vpop.permute.xlu0 %1907
        %1909 = vrot.lane.b32.xlu0 %v1889, 127
        %v1910 = vpop.permute.xlu0 %1909
        %1911 = vrot.lane.b32.xlu0 %v1890, 127
        %v1912 = vpop.permute.xlu0 %1911
        %1913 = vrot.lane.b32.xlu0 %v1891, 127
        %v1914 = vpop.permute.xlu0 %1913
        %1915 = vrot.lane.b32.xlu0 %v1892, 127
        %v1916 = vpop.permute.xlu0 %1915
        %v1925 = vadd.f32 %v1870, %v1902
        %v1926 = vadd.f32 %v1871, %v1904
        %v1927 = vadd.f32 %v1872, %v1906
        %v1928 = vadd.f32 %v1873, %v1908
        %v1929 = vadd.f32 %v1874, %v1910
        %v1930 = vadd.f32 %v1875, %v1912
        %v1931 = vadd.f32 %v1876, %v1914
        %v1932 = vadd.f32 %v1877, %v1916
        %s1933 = scalar_lea.vmem %s5, 104
        %v1934 = vld [vmem:[%s1933] sm:$0xff]
        %1936 = vset.pattern.permute.xlu0 0
        %1937 = vperm.xlu0 %1936, %v1934
        %v1938 = vpop.permute.xlu0 %1937
        %v1940 = vmul.f32 %v1938, %v1487
        %v1941 = vmul.f32 %v1938, %v1491
        %v1942 = vmul.f32 %v1938, %v1495
        %v1943 = vmul.f32 %v1938, %v1499
        %v1944 = vmul.f32 %v1938, %v1503
        %v1945 = vmul.f32 %v1938, %v1507
        %v1946 = vmul.f32 %v1938, %v1511
        %v1947 = vmul.f32 %v1938, %v1515
        %1956 = vrot.lane.b32.xlu0 %v1940, 127
        %v1957 = vpop.permute.xlu0 %1956
        %1958 = vrot.lane.b32.xlu0 %v1941, 127
        %v1959 = vpop.permute.xlu0 %1958
        %1960 = vrot.lane.b32.xlu0 %v1942, 127
        %v1961 = vpop.permute.xlu0 %1960
        %1962 = vrot.lane.b32.xlu0 %v1943, 127
        %v1963 = vpop.permute.xlu0 %1962
        %1964 = vrot.lane.b32.xlu0 %v1944, 127
        %v1965 = vpop.permute.xlu0 %1964
        %1966 = vrot.lane.b32.xlu0 %v1945, 127
        %v1967 = vpop.permute.xlu0 %1966
        %1968 = vrot.lane.b32.xlu0 %v1946, 127
        %v1969 = vpop.permute.xlu0 %1968
        %1970 = vrot.lane.b32.xlu0 %v1947, 127
        %v1971 = vpop.permute.xlu0 %1970
        %v1980 = vadd.f32 %v1925, %v1957
        %v1981 = vadd.f32 %v1926, %v1959
        %v1982 = vadd.f32 %v1927, %v1961
        %v1983 = vadd.f32 %v1928, %v1963
        %v1984 = vadd.f32 %v1929, %v1965
        %v1985 = vadd.f32 %v1930, %v1967
        %v1986 = vadd.f32 %v1931, %v1969
        %v1987 = vadd.f32 %v1932, %v1971
        %s1988 = scalar_lea.vmem %s5, 112
        %v1989 = vld [vmem:[%s1988] sm:$0xff]
        %1991 = vset.pattern.permute.xlu0 0
        %1992 = vperm.xlu0 %1991, %v1989
        %v1993 = vpop.permute.xlu0 %1992
        %v1995 = vmul.f32 %v1993, %v1550
        %v1996 = vmul.f32 %v1993, %v1554
        %v1997 = vmul.f32 %v1993, %v1558
        %v1998 = vmul.f32 %v1993, %v1562
        %v1999 = vmul.f32 %v1993, %v1566
        %v2000 = vmul.f32 %v1993, %v1570
        %v2001 = vmul.f32 %v1993, %v1574
        %v2002 = vmul.f32 %v1993, %v1578
        %2011 = vrot.lane.b32.xlu0 %v1995, 127
        %v2012 = vpop.permute.xlu0 %2011
        %2013 = vrot.lane.b32.xlu0 %v1996, 127
        %v2014 = vpop.permute.xlu0 %2013
        %2015 = vrot.lane.b32.xlu0 %v1997, 127
        %v2016 = vpop.permute.xlu0 %2015
        %2017 = vrot.lane.b32.xlu0 %v1998, 127
        %v2018 = vpop.permute.xlu0 %2017
        %2019 = vrot.lane.b32.xlu0 %v1999, 127
        %v2020 = vpop.permute.xlu0 %2019
        %2021 = vrot.lane.b32.xlu0 %v2000, 127
        %v2022 = vpop.permute.xlu0 %2021
        %2023 = vrot.lane.b32.xlu0 %v2001, 127
        %v2024 = vpop.permute.xlu0 %2023
        %2025 = vrot.lane.b32.xlu0 %v2002, 127
        %v2026 = vpop.permute.xlu0 %2025
        %v2035 = vadd.f32 %v1980, %v2012
        %v2036 = vadd.f32 %v1981, %v2014
        %v2037 = vadd.f32 %v1982, %v2016
        %v2038 = vadd.f32 %v1983, %v2018
        %v2039 = vadd.f32 %v1984, %v2020
        %v2040 = vadd.f32 %v1985, %v2022
        %v2041 = vadd.f32 %v1986, %v2024
        %v2042 = vadd.f32 %v1987, %v2026
        %s2043 = scalar_lea.vmem %s5, 120
        %v2044 = vld [vmem:[%s2043] sm:$0xff]
        %2046 = vset.pattern.permute.xlu0 0
        %2047 = vperm.xlu0 %2046, %v2044
        %v2048 = vpop.permute.xlu0 %2047
        %v2050 = vmul.f32 %v2048, %v1613
        %v2051 = vmul.f32 %v2048, %v1617
        %v2052 = vmul.f32 %v2048, %v1621
        %v2053 = vmul.f32 %v2048, %v1625
        %v2054 = vmul.f32 %v2048, %v1629
        %v2055 = vmul.f32 %v2048, %v1633
        %v2056 = vmul.f32 %v2048, %v1637
        %v2057 = vmul.f32 %v2048, %v1641
        %2066 = vrot.lane.b32.xlu0 %v2050, 127
        %v2067 = vpop.permute.xlu0 %2066
        %2068 = vrot.lane.b32.xlu0 %v2051, 127
        %v2069 = vpop.permute.xlu0 %2068
        %2070 = vrot.lane.b32.xlu0 %v2052, 127
        %v2071 = vpop.permute.xlu0 %2070
        %2072 = vrot.lane.b32.xlu0 %v2053, 127
        %v2073 = vpop.permute.xlu0 %2072
        %2074 = vrot.lane.b32.xlu0 %v2054, 127
        %v2075 = vpop.permute.xlu0 %2074
        %2076 = vrot.lane.b32.xlu0 %v2055, 127
        %v2077 = vpop.permute.xlu0 %2076
        %2078 = vrot.lane.b32.xlu0 %v2056, 127
        %v2079 = vpop.permute.xlu0 %2078
        %2080 = vrot.lane.b32.xlu0 %v2057, 127
        %v2081 = vpop.permute.xlu0 %2080
        %v2090 = vadd.f32 %v2035, %v2067
        %v2091 = vadd.f32 %v2036, %v2069
        %v2092 = vadd.f32 %v2037, %v2071
        %v2093 = vadd.f32 %v2038, %v2073
        %v2094 = vadd.f32 %v2039, %v2075
        %v2095 = vadd.f32 %v2040, %v2077
        %v2096 = vadd.f32 %v2041, %v2079
        %v2097 = vadd.f32 %v2042, %v2081
        %s2098 = scalar_lea.vmem %s5, 128
        %v2099 = vld [vmem:[%s2098] sm:$0xff]
        %2101 = vset.pattern.permute.xlu0 0
        %2102 = vperm.xlu0 %2101, %v2099
        %v2103 = vpop.permute.xlu0 %2102
        %v2105 = vmul.f32 %v2103, %v1172
        %v2106 = vmul.f32 %v2103, %v1176
        %v2107 = vmul.f32 %v2103, %v1180
        %v2108 = vmul.f32 %v2103, %v1184
        %v2109 = vmul.f32 %v2103, %v1188
        %v2110 = vmul.f32 %v2103, %v1192
        %v2111 = vmul.f32 %v2103, %v1196
        %v2112 = vmul.f32 %v2103, %v1200
        %2121 = vrot.lane.b32.xlu0 %v2105, 126
        %v2122 = vpop.permute.xlu0 %2121
        %2123 = vrot.lane.b32.xlu0 %v2106, 126
        %v2124 = vpop.permute.xlu0 %2123
        %2125 = vrot.lane.b32.xlu0 %v2107, 126
        %v2126 = vpop.permute.xlu0 %2125
        %2127 = vrot.lane.b32.xlu0 %v2108, 126
        %v2128 = vpop.permute.xlu0 %2127
        %2129 = vrot.lane.b32.xlu0 %v2109, 126
        %v2130 = vpop.permute.xlu0 %2129
        %2131 = vrot.lane.b32.xlu0 %v2110, 126
        %v2132 = vpop.permute.xlu0 %2131
        %2133 = vrot.lane.b32.xlu0 %v2111, 126
        %v2134 = vpop.permute.xlu0 %2133
        %2135 = vrot.lane.b32.xlu0 %v2112, 126
        %v2136 = vpop.permute.xlu0 %2135
        %v2145 = vadd.f32 %v2090, %v2122
        %v2146 = vadd.f32 %v2091, %v2124
        %v2147 = vadd.f32 %v2092, %v2126
        %v2148 = vadd.f32 %v2093, %v2128
        %v2149 = vadd.f32 %v2094, %v2130
        %v2150 = vadd.f32 %v2095, %v2132
        %v2151 = vadd.f32 %v2096, %v2134
        %v2152 = vadd.f32 %v2097, %v2136
        %s2153 = scalar_lea.vmem %s5, 136
        %v2154 = vld [vmem:[%s2153] sm:$0xff]
        %2156 = vset.pattern.permute.xlu0 0
        %2157 = vperm.xlu0 %2156, %v2154
        %v2158 = vpop.permute.xlu0 %2157
        %v2160 = vmul.f32 %v2158, %v1235
        %v2161 = vmul.f32 %v2158, %v1239
        %v2162 = vmul.f32 %v2158, %v1243
        %v2163 = vmul.f32 %v2158, %v1247
        %v2164 = vmul.f32 %v2158, %v1251
        %v2165 = vmul.f32 %v2158, %v1255
        %v2166 = vmul.f32 %v2158, %v1259
        %v2167 = vmul.f32 %v2158, %v1263
        %2176 = vrot.lane.b32.xlu0 %v2160, 126
        %v2177 = vpop.permute.xlu0 %2176
        %2178 = vrot.lane.b32.xlu0 %v2161, 126
        %v2179 = vpop.permute.xlu0 %2178
        %2180 = vrot.lane.b32.xlu0 %v2162, 126
        %v2181 = vpop.permute.xlu0 %2180
        %2182 = vrot.lane.b32.xlu0 %v2163, 126
        %v2183 = vpop.permute.xlu0 %2182
        %2184 = vrot.lane.b32.xlu0 %v2164, 126
        %v2185 = vpop.permute.xlu0 %2184
        %2186 = vrot.lane.b32.xlu0 %v2165, 126
        %v2187 = vpop.permute.xlu0 %2186
        %2188 = vrot.lane.b32.xlu0 %v2166, 126
        %v2189 = vpop.permute.xlu0 %2188
        %2190 = vrot.lane.b32.xlu0 %v2167, 126
        %v2191 = vpop.permute.xlu0 %2190
        %v2200 = vadd.f32 %v2145, %v2177
        %v2201 = vadd.f32 %v2146, %v2179
        %v2202 = vadd.f32 %v2147, %v2181
        %v2203 = vadd.f32 %v2148, %v2183
        %v2204 = vadd.f32 %v2149, %v2185
        %v2205 = vadd.f32 %v2150, %v2187
        %v2206 = vadd.f32 %v2151, %v2189
        %v2207 = vadd.f32 %v2152, %v2191
        %s2208 = scalar_lea.vmem %s5, 144
        %v2209 = vld [vmem:[%s2208] sm:$0xff]
        %2211 = vset.pattern.permute.xlu0 0
        %2212 = vperm.xlu0 %2211, %v2209
        %v2213 = vpop.permute.xlu0 %2212
        %v2215 = vmul.f32 %v2213, %v1298
        %v2216 = vmul.f32 %v2213, %v1302
        %v2217 = vmul.f32 %v2213, %v1306
        %v2218 = vmul.f32 %v2213, %v1310
        %v2219 = vmul.f32 %v2213, %v1314
        %v2220 = vmul.f32 %v2213, %v1318
        %v2221 = vmul.f32 %v2213, %v1322
        %v2222 = vmul.f32 %v2213, %v1326
        %2231 = vrot.lane.b32.xlu0 %v2215, 126
        %v2232 = vpop.permute.xlu0 %2231
        %2233 = vrot.lane.b32.xlu0 %v2216, 126
        %v2234 = vpop.permute.xlu0 %2233
        %2235 = vrot.lane.b32.xlu0 %v2217, 126
        %v2236 = vpop.permute.xlu0 %2235
        %2237 = vrot.lane.b32.xlu0 %v2218, 126
        %v2238 = vpop.permute.xlu0 %2237
        %2239 = vrot.lane.b32.xlu0 %v2219, 126
        %v2240 = vpop.permute.xlu0 %2239
        %2241 = vrot.lane.b32.xlu0 %v2220, 126
        %v2242 = vpop.permute.xlu0 %2241
        %2243 = vrot.lane.b32.xlu0 %v2221, 126
        %v2244 = vpop.permute.xlu0 %2243
        %2245 = vrot.lane.b32.xlu0 %v2222, 126
        %v2246 = vpop.permute.xlu0 %2245
        %v2255 = vadd.f32 %v2200, %v2232
        %v2256 = vadd.f32 %v2201, %v2234
        %v2257 = vadd.f32 %v2202, %v2236
        %v2258 = vadd.f32 %v2203, %v2238
        %v2259 = vadd.f32 %v2204, %v2240
        %v2260 = vadd.f32 %v2205, %v2242
        %v2261 = vadd.f32 %v2206, %v2244
        %v2262 = vadd.f32 %v2207, %v2246
        %s2263 = scalar_lea.vmem %s5, 152
        %v2264 = vld [vmem:[%s2263] sm:$0xff]
        %2266 = vset.pattern.permute.xlu0 0
        %2267 = vperm.xlu0 %2266, %v2264
        %v2268 = vpop.permute.xlu0 %2267
        %v2270 = vmul.f32 %v2268, %v1361
        %v2271 = vmul.f32 %v2268, %v1365
        %v2272 = vmul.f32 %v2268, %v1369
        %v2273 = vmul.f32 %v2268, %v1373
        %v2274 = vmul.f32 %v2268, %v1377
        %v2275 = vmul.f32 %v2268, %v1381
        %v2276 = vmul.f32 %v2268, %v1385
        %v2277 = vmul.f32 %v2268, %v1389
        %2286 = vrot.lane.b32.xlu0 %v2270, 126
        %v2287 = vpop.permute.xlu0 %2286
        %2288 = vrot.lane.b32.xlu0 %v2271, 126
        %v2289 = vpop.permute.xlu0 %2288
        %2290 = vrot.lane.b32.xlu0 %v2272, 126
        %v2291 = vpop.permute.xlu0 %2290
        %2292 = vrot.lane.b32.xlu0 %v2273, 126
        %v2293 = vpop.permute.xlu0 %2292
        %2294 = vrot.lane.b32.xlu0 %v2274, 126
        %v2295 = vpop.permute.xlu0 %2294
        %2296 = vrot.lane.b32.xlu0 %v2275, 126
        %v2297 = vpop.permute.xlu0 %2296
        %2298 = vrot.lane.b32.xlu0 %v2276, 126
        %v2299 = vpop.permute.xlu0 %2298
        %2300 = vrot.lane.b32.xlu0 %v2277, 126
        %v2301 = vpop.permute.xlu0 %2300
        %v2310 = vadd.f32 %v2255, %v2287
        %v2311 = vadd.f32 %v2256, %v2289
        %v2312 = vadd.f32 %v2257, %v2291
        %v2313 = vadd.f32 %v2258, %v2293
        %v2314 = vadd.f32 %v2259, %v2295
        %v2315 = vadd.f32 %v2260, %v2297
        %v2316 = vadd.f32 %v2261, %v2299
        %v2317 = vadd.f32 %v2262, %v2301
        %s2318 = scalar_lea.vmem %s5, 160
        %v2319 = vld [vmem:[%s2318] sm:$0xff]
        %2321 = vset.pattern.permute.xlu0 0
        %2322 = vperm.xlu0 %2321, %v2319
        %v2323 = vpop.permute.xlu0 %2322
        %v2325 = vmul.f32 %v2323, %v1424
        %v2326 = vmul.f32 %v2323, %v1428
        %v2327 = vmul.f32 %v2323, %v1432
        %v2328 = vmul.f32 %v2323, %v1436
        %v2329 = vmul.f32 %v2323, %v1440
        %v2330 = vmul.f32 %v2323, %v1444
        %v2331 = vmul.f32 %v2323, %v1448
        %v2332 = vmul.f32 %v2323, %v1452
        %2341 = vrot.lane.b32.xlu0 %v2325, 126
        %v2342 = vpop.permute.xlu0 %2341
        %2343 = vrot.lane.b32.xlu0 %v2326, 126
        %v2344 = vpop.permute.xlu0 %2343
        %2345 = vrot.lane.b32.xlu0 %v2327, 126
        %v2346 = vpop.permute.xlu0 %2345
        %2347 = vrot.lane.b32.xlu0 %v2328, 126
        %v2348 = vpop.permute.xlu0 %2347
        %2349 = vrot.lane.b32.xlu0 %v2329, 126
        %v2350 = vpop.permute.xlu0 %2349
        %2351 = vrot.lane.b32.xlu0 %v2330, 126
        %v2352 = vpop.permute.xlu0 %2351
        %2353 = vrot.lane.b32.xlu0 %v2331, 126
        %v2354 = vpop.permute.xlu0 %2353
        %2355 = vrot.lane.b32.xlu0 %v2332, 126
        %v2356 = vpop.permute.xlu0 %2355
        %v2365 = vadd.f32 %v2310, %v2342
        %v2366 = vadd.f32 %v2311, %v2344
        %v2367 = vadd.f32 %v2312, %v2346
        %v2368 = vadd.f32 %v2313, %v2348
        %v2369 = vadd.f32 %v2314, %v2350
        %v2370 = vadd.f32 %v2315, %v2352
        %v2371 = vadd.f32 %v2316, %v2354
        %v2372 = vadd.f32 %v2317, %v2356
        %s2373 = scalar_lea.vmem %s5, 168
        %v2374 = vld [vmem:[%s2373] sm:$0xff]
        %2376 = vset.pattern.permute.xlu0 0
        %2377 = vperm.xlu0 %2376, %v2374
        %v2378 = vpop.permute.xlu0 %2377
        %v2380 = vmul.f32 %v2378, %v1487
        %v2381 = vmul.f32 %v2378, %v1491
        %v2382 = vmul.f32 %v2378, %v1495
        %v2383 = vmul.f32 %v2378, %v1499
        %v2384 = vmul.f32 %v2378, %v1503
        %v2385 = vmul.f32 %v2378, %v1507
        %v2386 = vmul.f32 %v2378, %v1511
        %v2387 = vmul.f32 %v2378, %v1515
        %2396 = vrot.lane.b32.xlu0 %v2380, 126
        %v2397 = vpop.permute.xlu0 %2396
        %2398 = vrot.lane.b32.xlu0 %v2381, 126
        %v2399 = vpop.permute.xlu0 %2398
        %2400 = vrot.lane.b32.xlu0 %v2382, 126
        %v2401 = vpop.permute.xlu0 %2400
        %2402 = vrot.lane.b32.xlu0 %v2383, 126
        %v2403 = vpop.permute.xlu0 %2402
        %2404 = vrot.lane.b32.xlu0 %v2384, 126
        %v2405 = vpop.permute.xlu0 %2404
        %2406 = vrot.lane.b32.xlu0 %v2385, 126
        %v2407 = vpop.permute.xlu0 %2406
        %2408 = vrot.lane.b32.xlu0 %v2386, 126
        %v2409 = vpop.permute.xlu0 %2408
        %2410 = vrot.lane.b32.xlu0 %v2387, 126
        %v2411 = vpop.permute.xlu0 %2410
        %v2420 = vadd.f32 %v2365, %v2397
        %v2421 = vadd.f32 %v2366, %v2399
        %v2422 = vadd.f32 %v2367, %v2401
        %v2423 = vadd.f32 %v2368, %v2403
        %v2424 = vadd.f32 %v2369, %v2405
        %v2425 = vadd.f32 %v2370, %v2407
        %v2426 = vadd.f32 %v2371, %v2409
        %v2427 = vadd.f32 %v2372, %v2411
        %s2428 = scalar_lea.vmem %s5, 176
        %v2429 = vld [vmem:[%s2428] sm:$0xff]
        %2431 = vset.pattern.permute.xlu0 0
        %2432 = vperm.xlu0 %2431, %v2429
        %v2433 = vpop.permute.xlu0 %2432
        %v2435 = vmul.f32 %v2433, %v1550
        %v2436 = vmul.f32 %v2433, %v1554
        %v2437 = vmul.f32 %v2433, %v1558
        %v2438 = vmul.f32 %v2433, %v1562
        %v2439 = vmul.f32 %v2433, %v1566
        %v2440 = vmul.f32 %v2433, %v1570
        %v2441 = vmul.f32 %v2433, %v1574
        %v2442 = vmul.f32 %v2433, %v1578
        %2451 = vrot.lane.b32.xlu0 %v2435, 126
        %v2452 = vpop.permute.xlu0 %2451
        %2453 = vrot.lane.b32.xlu0 %v2436, 126
        %v2454 = vpop.permute.xlu0 %2453
        %2455 = vrot.lane.b32.xlu0 %v2437, 126
        %v2456 = vpop.permute.xlu0 %2455
        %2457 = vrot.lane.b32.xlu0 %v2438, 126
        %v2458 = vpop.permute.xlu0 %2457
        %2459 = vrot.lane.b32.xlu0 %v2439, 126
        %v2460 = vpop.permute.xlu0 %2459
        %2461 = vrot.lane.b32.xlu0 %v2440, 126
        %v2462 = vpop.permute.xlu0 %2461
        %2463 = vrot.lane.b32.xlu0 %v2441, 126
        %v2464 = vpop.permute.xlu0 %2463
        %2465 = vrot.lane.b32.xlu0 %v2442, 126
        %v2466 = vpop.permute.xlu0 %2465
        %v2475 = vadd.f32 %v2420, %v2452
        %v2476 = vadd.f32 %v2421, %v2454
        %v2477 = vadd.f32 %v2422, %v2456
        %v2478 = vadd.f32 %v2423, %v2458
        %v2479 = vadd.f32 %v2424, %v2460
        %v2480 = vadd.f32 %v2425, %v2462
        %v2481 = vadd.f32 %v2426, %v2464
        %v2482 = vadd.f32 %v2427, %v2466
        %s2483 = scalar_lea.vmem %s5, 184
        %v2484 = vld [vmem:[%s2483] sm:$0xff]
        %2486 = vset.pattern.permute.xlu0 0
        %2487 = vperm.xlu0 %2486, %v2484
        %v2488 = vpop.permute.xlu0 %2487
        %v2490 = vmul.f32 %v2488, %v1613
        %v2491 = vmul.f32 %v2488, %v1617
        %v2492 = vmul.f32 %v2488, %v1621
        %v2493 = vmul.f32 %v2488, %v1625
        %v2494 = vmul.f32 %v2488, %v1629
        %v2495 = vmul.f32 %v2488, %v1633
        %v2496 = vmul.f32 %v2488, %v1637
        %v2497 = vmul.f32 %v2488, %v1641
        %2506 = vrot.lane.b32.xlu0 %v2490, 126
        %v2507 = vpop.permute.xlu0 %2506
        %2508 = vrot.lane.b32.xlu0 %v2491, 126
        %v2509 = vpop.permute.xlu0 %2508
        %2510 = vrot.lane.b32.xlu0 %v2492, 126
        %v2511 = vpop.permute.xlu0 %2510
        %2512 = vrot.lane.b32.xlu0 %v2493, 126
        %v2513 = vpop.permute.xlu0 %2512
        %2514 = vrot.lane.b32.xlu0 %v2494, 126
        %v2515 = vpop.permute.xlu0 %2514
        %2516 = vrot.lane.b32.xlu0 %v2495, 126
        %v2517 = vpop.permute.xlu0 %2516
        %2518 = vrot.lane.b32.xlu0 %v2496, 126
        %v2519 = vpop.permute.xlu0 %2518
        %2520 = vrot.lane.b32.xlu0 %v2497, 126
        %v2521 = vpop.permute.xlu0 %2520
        %v2530 = vadd.f32 %v2475, %v2507
        %v2531 = vadd.f32 %v2476, %v2509
        %v2532 = vadd.f32 %v2477, %v2511
        %v2533 = vadd.f32 %v2478, %v2513
        %v2534 = vadd.f32 %v2479, %v2515
        %v2535 = vadd.f32 %v2480, %v2517
        %v2536 = vadd.f32 %v2481, %v2519
        %v2537 = vadd.f32 %v2482, %v2521
        %v2538 = vld [vmem:[%s6] sm:$0xff]
        %2540 = vset.pattern.permute.xlu0 0
        %2541 = vperm.xlu0 %2540, %v2538
        %v2542 = vpop.permute.xlu0 %2541
        %v2544 = vadd.f32 %v2530, %v2542
        %v2545 = vadd.f32 %v2531, %v2542
        %v2546 = vadd.f32 %v2532, %v2542
        %v2547 = vadd.f32 %v2533, %v2542
        %v2548 = vadd.f32 %v2534, %v2542
        %v2549 = vadd.f32 %v2535, %v2542
        %v2550 = vadd.f32 %v2536, %v2542
        %v2551 = vadd.f32 %v2537, %v2542
        %vm2552 = vcmask 130048
        %2553 = vst.msk [vmem:[%s272] sm:$0xff] %vm2552, %v2544
        %2554 = vst.msk [vmem:[%s272 + $0x8] sm:$0xff] %vm2552, %v2545
        %2555 = vst.msk [vmem:[%s272 + $0x10] sm:$0xff] %vm2552, %v2546
        %2556 = vst.msk [vmem:[%s272 + $0x18] sm:$0xff] %vm2552, %v2547
        %2557 = vst.msk [vmem:[%s272 + $0x20] sm:$0xff] %vm2552, %v2548
        %2558 = vst.msk [vmem:[%s272 + $0x28] sm:$0xff] %vm2552, %v2549
        %2559 = vst.msk [vmem:[%s272 + $0x30] sm:$0xff] %vm2552, %v2550
        %2560 = vst.msk [vmem:[%s272 + $0x38] sm:$0xff] %vm2552, %v2551
        %s2561 = sand.u32 %s181, 1
        %s2562 = scalar_lea.sflag [#allocation5], %s2561
        %s2563 = sand.u32 %s181, 1
        %s2564 = smul.addr %s2563, 64
        %s2565 = scalar_lea.vmem [#allocation4], %s2564
        // Predicated region
        $region49: #{tpu_custom_call.1} parent=47 // pred_check
          %p2566 = pneg %p191
        $region50: #{tpu_custom_call.1} parent=47 // pred_check_branch
          %2568 = sbr.rel (%p2566) target = $region52
        $region51: #{tpu_custom_call.1} parent=47 // pred_region
          %s2569 = smul.u32 8, %s21
          %s2571 = ssub.s32 1024, 1024
          %2572 = vsyncadd %s2562, %s2571
          %s2573 = smul.addr %s2569, 128
          %s2574 = scalar_lea.hbm %s7, %s2573
          %s2575 = sshll.u32 %s2565, 4
          %s2576 = int_to_ptr.vmem [resolvable:$true] %s2575
          %2581 = dma.vmem_to_hbm [thread:$0]  %s2576, 1024, %s2574, %s2562, 128, 128, 8
        $region52: #{tpu_custom_call.1} parent=47 // pred_fallthru
          _
      $region48: #{tpu_custom_call.1} parent=5 // pred_fallthru
        _
      %p2582 = scmp.le.s32.totalorder 2, %s16
      // Predicated region
      $region53: #{tpu_custom_call.1} parent=5 // pred_check
        %p2583 = pneg %p2582
      $region54: #{tpu_custom_call.1} parent=5 // pred_check_branch
        %2585 = sbr.rel (%p2583) target = $region56
      $region55: #{tpu_custom_call.1} parent=5 // pred_region
        %s2586 = ssub.s32 %s16, 2
        // Predicated region
        $region57: #{tpu_custom_call.1} parent=55 // pred_check
          %p2587 = pneg %p197
        $region58: #{tpu_custom_call.1} parent=55 // pred_check_branch
          %2589 = sbr.rel (%p2587) target = $region60
        $region59: #{tpu_custom_call.1} parent=55 // pred_region
          %s2590 = sand.u32 %s182, 1
          %s2591 = scalar_lea.sflag [#allocation5], %s2590
          %s2592 = sand.u32 %s182, 1
          %s2593 = smul.addr %s2592, 64
          %s2594 = scalar_lea.vmem [#allocation4], %s2593
          %2595 = dma.done %s2591, 1024
        $region60: #{tpu_custom_call.1} parent=55 // pred_fallthru
          _
      $region56: #{tpu_custom_call.1} parent=5 // pred_fallthru
        _
    $region6: #{tpu_custom_call.1} parent=1 // loop_footer
      %s20 = sadd.s32 1, %s16
    $region7: #{tpu_custom_call.1} parent=1 // loop_footer_branch
      %15 = sbr.rel target = $region3
    $region8: #{tpu_custom_call.1} parent=1 // loop_exit
      _
    %2596 = vsyncpa [#allocation5], 1
    %s2597 = scalar_lea.sflag [#allocation5], 1
    %2598 = vsyncpa %s2597, 1

</llo_original>
